<compile_context>
chip_gen: v7x
topology: tpu7x:2x2x1
jax: 0.10.0
libtpu: 0.0.40
codegen_flags: <defaults>
</compile_context>

<pallas_src>
import functools
import math

import jax
import jax.numpy as jnp
from jax import lax
from jax.experimental import pallas as pl
from jax.experimental.pallas import tpu as pltpu


def _attention_kernel(hs_q_ref, hs_kv_ref, wq_ref, bq_ref, wkv_ref, bkv_ref,
                      wo_ref, bo_ref, gamma_ref, beta_ref, out_ref,
                      *, num_heads, head_dim, ln_eps):
    """One grid step = (batch element, q-tile). All refs live in VMEM."""
    hidden = num_heads * head_dim
    tq = hs_q_ref.shape[1]

    x_q = hs_q_ref[0].astype(jnp.float32)                 # (tq, H) f32 residual copy
    xq_bf = x_q.astype(jnp.bfloat16)
    xkv_bf = hs_kv_ref[0].astype(jnp.bfloat16)             # (S, H)

    scale = 1.0 / math.sqrt(head_dim)

    # ---- projections: Q for this q-tile, fused K|V for the full sequence (MXU, bf16 in / f32 acc)
    q = jnp.dot(xq_bf, wq_ref[...], preferred_element_type=jnp.float32) + bq_ref[...]
    kv = jnp.dot(xkv_bf, wkv_ref[...], preferred_element_type=jnp.float32) + bkv_ref[...]
    q_bf = (q * scale).astype(jnp.bfloat16)                 # fold 1/sqrt(hd) into Q once
    k_bf = kv[:, :hidden].astype(jnp.bfloat16)
    v_bf = kv[:, hidden:].astype(jnp.bfloat16)

    # ---- per-head attention; accumulate output projection per head (no lane concat)
    proj = jnp.zeros((tq, hidden), jnp.float32)
    for h in range(num_heads):                              # static unroll (small count)
        lo = h * head_dim
        qh = q_bf[:, lo:lo + head_dim]                      # (tq, hd)
        kh = k_bf[:, lo:lo + head_dim]                      # (S, hd)
        vh = v_bf[:, lo:lo + head_dim]                      # (S, hd)

        # Q K^T without materializing a transpose: contract last dims of both.
        s = lax.dot_general(qh, kh, (((1,), (1,)), ((), ())),
                            preferred_element_type=jnp.float32)        # (tq, S)
        s = s - jnp.max(s, axis=-1, keepdims=True)
        p = jnp.exp(s)                                      # f32 softmax (stable)
        p = p * pl.reciprocal(jnp.sum(p, axis=-1, keepdims=True), approx=True)
        # TODO(synk): attention-probability dropout omitted (eval-mode identity).

        ctx_h = jnp.dot(p.astype(jnp.bfloat16), vh,
                        preferred_element_type=jnp.float32)             # (tq, hd)
        # ctx_h @ Wo[h*hd:(h+1)*hd, :] -> lane-dense (tq, H) accumulation;
        # replaces the per-head lane slices + jnp.concatenate of the old version.
        proj = proj + jnp.dot(ctx_h.astype(jnp.bfloat16),
                              wo_ref[lo:lo + head_dim, :],
                              preferred_element_type=jnp.float32)

    # ---- BertSelfOutput: bias + residual + LayerNorm (all f32) ----
    resid = proj + bo_ref[...] + x_q
    mean = jnp.mean(resid, axis=-1, keepdims=True)
    centered = resid - mean
    var = jnp.mean(centered * centered, axis=-1, keepdims=True)
    normed = centered * lax.rsqrt(var + ln_eps)
    out = normed * gamma_ref[...] + beta_ref[...]

    out_ref[0] = out.astype(out_ref.dtype)


def attention_forward(hidden_states, params, *, num_heads, ln_eps=1e-12, q_tile=256):
    """hidden_states: (B, S, H) float32. Returns (B, S, H)."""
    B, S, H = hidden_states.shape
    assert H % num_heads == 0
    head_dim = H // num_heads

    # Query-tile size: tile when S is an exact multiple of q_tile, else whole S.
    # TODO(synk): arbitrary S would need padding/masking for ragged last tiles.
    tq = q_tile if (S >= q_tile and S % q_tile == 0) else S
    n_q = S // tq

    # bf16 weights for the MXU; biases / LayerNorm params stay f32 (VPU math in f32).
    w_q = params["wq"].astype(jnp.bfloat16)
    w_kv = jnp.concatenate([params["wk"], params["wv"]], axis=1).astype(jnp.bfloat16)
    w_o = params["wo"].astype(jnp.bfloat16)
    b_q = params["bq"].astype(jnp.float32)
    b_kv = jnp.concatenate([params["bk"], params["bv"]], axis=1).astype(jnp.float32)
    b_o = params["bo"].astype(jnp.float32)
    gamma = params["gamma"].astype(jnp.float32)
    beta = params["beta"].astype(jnp.float32)

    kernel = functools.partial(_attention_kernel,
                               num_heads=num_heads,
                               head_dim=head_dim,
                               ln_eps=ln_eps)

    # --- explicit VMEM budget (double-buffered I/O + weights + live intermediates)
    f32b, bf16b = 4, 2
    vmem_est = (
        2 * (tq * H + S * H + tq * H) * f32b              # hs_q / hs_kv / out blocks
        + 2 * (H * H + H * 2 * H + H * H) * bf16b         # bf16 weight blocks
        + 2 * 6 * 8 * max(H, 128) * f32b                  # padded (1,H)/(1,2H) vectors
        + (3 * tq * H + 2 * S * H + 2 * tq * S + 2 * tq * H) * f32b)  # intermediates
    vmem_limit = int(min(64 * 2 ** 20, max(32 * 2 ** 20, 2 * vmem_est)))

    # --- advisory cost estimate so XLA schedules around a compute-heavy call
    flops = (2 * B * S * H * H                     # Q projection
             + 2 * B * n_q * S * (2 * H) * H       # fused K/V projection (per q-tile)
             + 4 * B * S * S * H                   # QK^T + P@V
             + 2 * B * S * H * H)                  # output dense
    bytes_accessed = (2 * 4 * B * S * H            # hidden_states in + out (f32)
                      + 2 * (H * H + H * 2 * H + H * H)   # bf16 weights
                      + 4 * 6 * H)                 # biases / gamma / beta
    cost = pl.CostEstimate(flops=int(flops),
                           transcendentals=int(B * num_heads * S * S),
                           bytes_accessed=int(bytes_accessed))

    const2d = lambda shape: pl.BlockSpec(shape, lambda b, qi: (0, 0))

    return pl.pallas_call(
        kernel,
        out_shape=jax.ShapeDtypeStruct((B, S, H), hidden_states.dtype),
        grid_spec=pltpu.PrefetchScalarGridSpec(
            num_scalar_prefetch=0,
            grid=(B, n_q),
            in_specs=[
                pl.BlockSpec((1, tq, H), lambda b, qi: (b, qi, 0)),  # hs (query rows)
                pl.BlockSpec((1, S, H), lambda b, qi: (b, 0, 0)),    # hs (full seq for K/V)
                const2d((H, H)),        # Wq  (bf16)
                const2d((1, H)),        # bq
                const2d((H, 2 * H)),    # W_kv (bf16)
                const2d((1, 2 * H)),    # b_kv
                const2d((H, H)),        # Wo  (bf16)
                const2d((1, H)),        # bo
                const2d((1, H)),        # gamma
                const2d((1, H)),        # beta
            ],
            out_specs=pl.BlockSpec((1, tq, H), lambda b, qi: (b, qi, 0)),
        ),
        compiler_params=pltpu.CompilerParams(
            dimension_semantics=("parallel", "parallel"),
            vmem_limit_bytes=vmem_limit),
        cost_estimate=cost,
    )(hidden_states, hidden_states,
      w_q, b_q, w_kv, b_kv, w_o, b_o, gamma, beta)


def _reference(hidden_states, params, *, num_heads, ln_eps=1e-12):
    """Pure-JAX f32 reference mirroring HF BertAttention forward (eval mode)."""
    B, S, H = hidden_states.shape
    hd = H // num_heads
    x = hidden_states.astype(jnp.float32)

    def proj(w, b):
        return (x @ w + b[0]).reshape(B, S, num_heads, hd).transpose(0, 2, 1, 3)

    q = proj(params["wq"], params["bq"])
    k = proj(params["wk"], params["bk"])
    v = proj(params["wv"], params["bv"])

    scores = jnp.einsum("bhqd,bhkd->bhqk", q, k) / math.sqrt(hd)
    probs = jax.nn.softmax(scores, axis=-1)
    ctx = jnp.einsum("bhqk,bhkd->bhqd", probs, v).transpose(0, 2, 1, 3).reshape(B, S, H)

    out = ctx @ params["wo"] + params["bo"][0] + x
    mean = out.mean(-1, keepdims=True)
    var = ((out - mean) ** 2).mean(-1, keepdims=True)
    return ((out - mean) * lax.rsqrt(var + ln_eps)) * params["gamma"][0] + params["beta"][0]


def _init_params(key, hidden_size):
    ks = jax.random.split(key, 8)
    scale = 0.02

    def lin(kw, kb):
        return (scale * jax.random.normal(kw, (hidden_size, hidden_size), jnp.float32),
                scale * jax.random.normal(kb, (1, hidden_size), jnp.float32))

    wq, bq = lin(ks[0], ks[1])
    wk, bk = lin(ks[2], ks[3])
    wv, bv = lin(ks[4], ks[5])
    wo, bo = lin(ks[6], ks[7])
    return dict(wq=wq, bq=bq, wk=wk, bk=bk, wv=wv, bv=bv, wo=wo, bo=bo,
                gamma=jnp.ones((1, hidden_size), jnp.float32),
                beta=jnp.zeros((1, hidden_size), jnp.float32))


if __name__ == "__main__":
    # Small BERT-like config: batch=2, seq=8, hidden=32, 4 heads (head_dim=8).
    B, S, H, NUM_HEADS = 2, 8, 32, 4

    key = jax.random.PRNGKey(0)
    k_x, k_p = jax.random.split(key)
    x = jax.random.normal(k_x, (B, S, H), jnp.float32)
    params = _init_params(k_p, H)

    out = attention_forward(x, params, num_heads=NUM_HEADS)
    out = jax.block_until_ready(out)

    ref = _reference(x, params, num_heads=NUM_HEADS)
    assert out.shape == (B, S, H)
    # bf16 MXU inputs (f32 accumulation) vs a pure-f32 reference -> relaxed tolerance.
    max_err = float(jnp.max(jnp.abs(out - ref)))
    assert jnp.allclose(out, ref, atol=1e-2, rtol=1e-2), f"mismatch vs reference (max err {max_err})"

    print("KERNEL_OK")
</pallas_src>

<mosaic_0001>
module attributes {stable_mosaic.version = 11 : i64} {
  func.func @_attention_kernel(%arg0: i32, %arg1: i32, %arg2: memref<1x8x32xf32, #tpu.memory_space<vmem>>, %arg3: memref<1x8x32xf32, #tpu.memory_space<vmem>>, %arg4: memref<32x32xbf16, #tpu.memory_space<vmem>>, %arg5: memref<1x32xf32, #tpu.memory_space<vmem>>, %arg6: memref<32x64xbf16, #tpu.memory_space<vmem>>, %arg7: memref<1x64xf32, #tpu.memory_space<vmem>>, %arg8: memref<32x32xbf16, #tpu.memory_space<vmem>>, %arg9: memref<1x32xf32, #tpu.memory_space<vmem>>, %arg10: memref<1x32xf32, #tpu.memory_space<vmem>>, %arg11: memref<1x32xf32, #tpu.memory_space<vmem>>, %arg12: memref<1x8x32xf32, #tpu.memory_space<vmem>>) attributes {dimension_semantics = [#tpu.dimension_semantics<parallel>, #tpu.dimension_semantics<parallel>], iteration_bounds = array<i64: 2, 1>, scalar_prefetch = 0 : i64, scratch_operands = 0 : i64, tpu.core_type = #tpu.core_type<tc>, window_params = [{transform_indices = @transform_0, window_bounds = array<i64: 1, 8, 32>}, {transform_indices = @transform_1, window_bounds = array<i64: 1, 8, 32>}, {pipeline_mode = #tpu.pipeline_mode<synchronous>, transform_indices = @transform_2, window_bounds = array<i64: 32, 32>}, {pipeline_mode = #tpu.pipeline_mode<synchronous>, transform_indices = @transform_3, window_bounds = array<i64: 1, 32>}, {pipeline_mode = #tpu.pipeline_mode<synchronous>, transform_indices = @transform_4, window_bounds = array<i64: 32, 64>}, {pipeline_mode = #tpu.pipeline_mode<synchronous>, transform_indices = @transform_5, window_bounds = array<i64: 1, 64>}, {pipeline_mode = #tpu.pipeline_mode<synchronous>, transform_indices = @transform_6, window_bounds = array<i64: 32, 32>}, {pipeline_mode = #tpu.pipeline_mode<synchronous>, transform_indices = @transform_7, window_bounds = array<i64: 1, 32>}, {pipeline_mode = #tpu.pipeline_mode<synchronous>, transform_indices = @transform_8, window_bounds = array<i64: 1, 32>}, {pipeline_mode = #tpu.pipeline_mode<synchronous>, transform_indices = @transform_9, window_bounds = array<i64: 1, 32>}, {transform_indices = @transform_10, window_bounds = array<i64: 1, 8, 32>}]} {
    %c0 = arith.constant 0 : index
    %c0_0 = arith.constant 0 : index
    %c0_1 = arith.constant 0 : index
    %0 = vector.load %arg2[%c0, %c0_0, %c0_1] : memref<1x8x32xf32, #tpu.memory_space<vmem>>, vector<1x8x32xf32>
    %1 = vector.shape_cast %0 : vector<1x8x32xf32> to vector<8x32xf32>
    %2 = arith.truncf %1 : vector<8x32xf32> to vector<8x32xbf16>
    %c0_2 = arith.constant 0 : index
    %c0_3 = arith.constant 0 : index
    %c0_4 = arith.constant 0 : index
    %3 = vector.load %arg3[%c0_2, %c0_3, %c0_4] : memref<1x8x32xf32, #tpu.memory_space<vmem>>, vector<1x8x32xf32>
    %4 = vector.shape_cast %3 : vector<1x8x32xf32> to vector<8x32xf32>
    %5 = arith.truncf %4 : vector<8x32xf32> to vector<8x32xbf16>
    %c0_5 = arith.constant 0 : index
    %c0_6 = arith.constant 0 : index
    %6 = vector.load %arg4[%c0_5, %c0_6] : memref<32x32xbf16, #tpu.memory_space<vmem>>, vector<32x32xbf16>
    %cst = arith.constant dense<0.000000e+00> : vector<8x32xf32>
    %7 = tpu.matmul %2, %6, %cst {dimension_numbers = #tpu.dot_dimension_numbers<[1], [0], [0], [1], [0, 0, 1, 1], [], []>} : vector<8x32xbf16>, vector<32x32xbf16>, vector<8x32xf32> -> vector<8x32xf32>
    %c0_7 = arith.constant 0 : index
    %c0_8 = arith.constant 0 : index
    %8 = vector.load %arg5[%c0_7, %c0_8] : memref<1x32xf32, #tpu.memory_space<vmem>>, vector<1x32xf32>
    %9 = vector.broadcast %8 : vector<1x32xf32> to vector<8x32xf32>
    %10 = arith.addf %7, %9 : vector<8x32xf32>
    %c0_9 = arith.constant 0 : index
    %c0_10 = arith.constant 0 : index
    %11 = vector.load %arg6[%c0_9, %c0_10] : memref<32x64xbf16, #tpu.memory_space<vmem>>, vector<32x64xbf16>
    %cst_11 = arith.constant dense<0.000000e+00> : vector<8x64xf32>
    %12 = tpu.matmul %5, %11, %cst_11 {dimension_numbers = #tpu.dot_dimension_numbers<[1], [0], [0], [1], [0, 0, 1, 1], [], []>} : vector<8x32xbf16>, vector<32x64xbf16>, vector<8x64xf32> -> vector<8x64xf32>
    %c0_12 = arith.constant 0 : index
    %c0_13 = arith.constant 0 : index
    %13 = vector.load %arg7[%c0_12, %c0_13] : memref<1x64xf32, #tpu.memory_space<vmem>>, vector<1x64xf32>
    %14 = vector.broadcast %13 : vector<1x64xf32> to vector<8x64xf32>
    %15 = arith.addf %12, %14 : vector<8x64xf32>
    %cst_14 = arith.constant 0.353553385 : f32
    %16 = vector.broadcast %cst_14 : f32 to vector<8x32xf32>
    %17 = arith.mulf %10, %16 : vector<8x32xf32>
    %18 = arith.truncf %17 : vector<8x32xf32> to vector<8x32xbf16>
    %19 = vector.extract_strided_slice %15 {offsets = [0, 0], sizes = [8, 32], strides = [1, 1]} : vector<8x64xf32> to vector<8x32xf32>
    %20 = arith.truncf %19 : vector<8x32xf32> to vector<8x32xbf16>
    %21 = vector.extract_strided_slice %15 {offsets = [0, 32], sizes = [8, 32], strides = [1, 1]} : vector<8x64xf32> to vector<8x32xf32>
    %22 = arith.truncf %21 : vector<8x32xf32> to vector<8x32xbf16>
    %cst_15 = arith.constant 0.000000e+00 : f32
    %23 = vector.broadcast %cst_15 : f32 to vector<8x32xf32>
    %24 = vector.extract_strided_slice %18 {offsets = [0, 0], sizes = [8, 8], strides = [1, 1]} : vector<8x32xbf16> to vector<8x8xbf16>
    %25 = vector.extract_strided_slice %20 {offsets = [0, 0], sizes = [8, 8], strides = [1, 1]} : vector<8x32xbf16> to vector<8x8xbf16>
    %26 = vector.extract_strided_slice %22 {offsets = [0, 0], sizes = [8, 8], strides = [1, 1]} : vector<8x32xbf16> to vector<8x8xbf16>
    %cst_16 = arith.constant dense<0.000000e+00> : vector<8x8xf32>
    %27 = tpu.matmul %24, %25, %cst_16 {dimension_numbers = #tpu.dot_dimension_numbers<[1], [1], [0], [0], [0, 0, 1, 0], [], []>} : vector<8x8xbf16>, vector<8x8xbf16>, vector<8x8xf32> -> vector<8x8xf32>
    %cst_17 = arith.constant dense<0xFF800000> : vector<8xf32>
    %28 = vector.multi_reduction <maximumf>, %27, %cst_17 [1] : vector<8x8xf32> to vector<8xf32>
    %29 = vector.shape_cast %28 : vector<8xf32> to vector<8x1xf32>
    %30 = vector.broadcast %29 : vector<8x1xf32> to vector<8x8xf32>
    %31 = arith.subf %27, %30 : vector<8x8xf32>
    %32 = math.exp %31 : vector<8x8xf32>
    %cst_18 = arith.constant dense<0.000000e+00> : vector<8xf32>
    %33 = vector.multi_reduction <add>, %32, %cst_18 [1] : vector<8x8xf32> to vector<8xf32>
    %34 = vector.shape_cast %33 : vector<8xf32> to vector<8x1xf32>
    %35 = tpu.reciprocal %34 {approx = true} : vector<8x1xf32> -> vector<8x1xf32>
    %36 = vector.broadcast %35 : vector<8x1xf32> to vector<8x8xf32>
    %37 = arith.mulf %32, %36 : vector<8x8xf32>
    %38 = arith.truncf %37 : vector<8x8xf32> to vector<8x8xbf16>
    %cst_19 = arith.constant dense<0.000000e+00> : vector<8x8xf32>
    %39 = tpu.matmul %38, %26, %cst_19 {dimension_numbers = #tpu.dot_dimension_numbers<[1], [0], [0], [1], [0, 0, 1, 1], [], []>} : vector<8x8xbf16>, vector<8x8xbf16>, vector<8x8xf32> -> vector<8x8xf32>
    %40 = arith.truncf %39 : vector<8x8xf32> to vector<8x8xbf16>
    %c0_20 = arith.constant 0 : index
    %c0_21 = arith.constant 0 : index
    %41 = vector.load %arg8[%c0_20, %c0_21] : memref<32x32xbf16, #tpu.memory_space<vmem>>, vector<8x32xbf16>
    %cst_22 = arith.constant dense<0.000000e+00> : vector<8x32xf32>
    %42 = tpu.matmul %40, %41, %cst_22 {dimension_numbers = #tpu.dot_dimension_numbers<[1], [0], [0], [1], [0, 0, 1, 1], [], []>} : vector<8x8xbf16>, vector<8x32xbf16>, vector<8x32xf32> -> vector<8x32xf32>
    %43 = arith.addf %23, %42 : vector<8x32xf32>
    %44 = vector.extract_strided_slice %18 {offsets = [0, 8], sizes = [8, 8], strides = [1, 1]} : vector<8x32xbf16> to vector<8x8xbf16>
    %45 = vector.extract_strided_slice %20 {offsets = [0, 8], sizes = [8, 8], strides = [1, 1]} : vector<8x32xbf16> to vector<8x8xbf16>
    %46 = vector.extract_strided_slice %22 {offsets = [0, 8], sizes = [8, 8], strides = [1, 1]} : vector<8x32xbf16> to vector<8x8xbf16>
    %cst_23 = arith.constant dense<0.000000e+00> : vector<8x8xf32>
    %47 = tpu.matmul %44, %45, %cst_23 {dimension_numbers = #tpu.dot_dimension_numbers<[1], [1], [0], [0], [0, 0, 1, 0], [], []>} : vector<8x8xbf16>, vector<8x8xbf16>, vector<8x8xf32> -> vector<8x8xf32>
    %cst_24 = arith.constant dense<0xFF800000> : vector<8xf32>
    %48 = vector.multi_reduction <maximumf>, %47, %cst_24 [1] : vector<8x8xf32> to vector<8xf32>
    %49 = vector.shape_cast %48 : vector<8xf32> to vector<8x1xf32>
    %50 = vector.broadcast %49 : vector<8x1xf32> to vector<8x8xf32>
    %51 = arith.subf %47, %50 : vector<8x8xf32>
    %52 = math.exp %51 : vector<8x8xf32>
    %cst_25 = arith.constant dense<0.000000e+00> : vector<8xf32>
    %53 = vector.multi_reduction <add>, %52, %cst_25 [1] : vector<8x8xf32> to vector<8xf32>
    %54 = vector.shape_cast %53 : vector<8xf32> to vector<8x1xf32>
    %55 = tpu.reciprocal %54 {approx = true} : vector<8x1xf32> -> vector<8x1xf32>
    %56 = vector.broadcast %55 : vector<8x1xf32> to vector<8x8xf32>
    %57 = arith.mulf %52, %56 : vector<8x8xf32>
    %58 = arith.truncf %57 : vector<8x8xf32> to vector<8x8xbf16>
    %cst_26 = arith.constant dense<0.000000e+00> : vector<8x8xf32>
    %59 = tpu.matmul %58, %46, %cst_26 {dimension_numbers = #tpu.dot_dimension_numbers<[1], [0], [0], [1], [0, 0, 1, 1], [], []>} : vector<8x8xbf16>, vector<8x8xbf16>, vector<8x8xf32> -> vector<8x8xf32>
    %60 = arith.truncf %59 : vector<8x8xf32> to vector<8x8xbf16>
    %c8 = arith.constant 8 : index
    %c0_27 = arith.constant 0 : index
    %61 = vector.load %arg8[%c8, %c0_27] : memref<32x32xbf16, #tpu.memory_space<vmem>>, vector<8x32xbf16>
    %cst_28 = arith.constant dense<0.000000e+00> : vector<8x32xf32>
    %62 = tpu.matmul %60, %61, %cst_28 {dimension_numbers = #tpu.dot_dimension_numbers<[1], [0], [0], [1], [0, 0, 1, 1], [], []>} : vector<8x8xbf16>, vector<8x32xbf16>, vector<8x32xf32> -> vector<8x32xf32>
    %63 = arith.addf %43, %62 : vector<8x32xf32>
    %64 = vector.extract_strided_slice %18 {offsets = [0, 16], sizes = [8, 8], strides = [1, 1]} : vector<8x32xbf16> to vector<8x8xbf16>
    %65 = vector.extract_strided_slice %20 {offsets = [0, 16], sizes = [8, 8], strides = [1, 1]} : vector<8x32xbf16> to vector<8x8xbf16>
    %66 = vector.extract_strided_slice %22 {offsets = [0, 16], sizes = [8, 8], strides = [1, 1]} : vector<8x32xbf16> to vector<8x8xbf16>
    %cst_29 = arith.constant dense<0.000000e+00> : vector<8x8xf32>
    %67 = tpu.matmul %64, %65, %cst_29 {dimension_numbers = #tpu.dot_dimension_numbers<[1], [1], [0], [0], [0, 0, 1, 0], [], []>} : vector<8x8xbf16>, vector<8x8xbf16>, vector<8x8xf32> -> vector<8x8xf32>
    %cst_30 = arith.constant dense<0xFF800000> : vector<8xf32>
    %68 = vector.multi_reduction <maximumf>, %67, %cst_30 [1] : vector<8x8xf32> to vector<8xf32>
    %69 = vector.shape_cast %68 : vector<8xf32> to vector<8x1xf32>
    %70 = vector.broadcast %69 : vector<8x1xf32> to vector<8x8xf32>
    %71 = arith.subf %67, %70 : vector<8x8xf32>
    %72 = math.exp %71 : vector<8x8xf32>
    %cst_31 = arith.constant dense<0.000000e+00> : vector<8xf32>
    %73 = vector.multi_reduction <add>, %72, %cst_31 [1] : vector<8x8xf32> to vector<8xf32>
    %74 = vector.shape_cast %73 : vector<8xf32> to vector<8x1xf32>
    %75 = tpu.reciprocal %74 {approx = true} : vector<8x1xf32> -> vector<8x1xf32>
    %76 = vector.broadcast %75 : vector<8x1xf32> to vector<8x8xf32>
    %77 = arith.mulf %72, %76 : vector<8x8xf32>
    %78 = arith.truncf %77 : vector<8x8xf32> to vector<8x8xbf16>
    %cst_32 = arith.constant dense<0.000000e+00> : vector<8x8xf32>
    %79 = tpu.matmul %78, %66, %cst_32 {dimension_numbers = #tpu.dot_dimension_numbers<[1], [0], [0], [1], [0, 0, 1, 1], [], []>} : vector<8x8xbf16>, vector<8x8xbf16>, vector<8x8xf32> -> vector<8x8xf32>
    %80 = arith.truncf %79 : vector<8x8xf32> to vector<8x8xbf16>
    %c16 = arith.constant 16 : index
    %c0_33 = arith.constant 0 : index
    %81 = vector.load %arg8[%c16, %c0_33] : memref<32x32xbf16, #tpu.memory_space<vmem>>, vector<8x32xbf16>
    %cst_34 = arith.constant dense<0.000000e+00> : vector<8x32xf32>
    %82 = tpu.matmul %80, %81, %cst_34 {dimension_numbers = #tpu.dot_dimension_numbers<[1], [0], [0], [1], [0, 0, 1, 1], [], []>} : vector<8x8xbf16>, vector<8x32xbf16>, vector<8x32xf32> -> vector<8x32xf32>
    %83 = arith.addf %63, %82 : vector<8x32xf32>
    %84 = vector.extract_strided_slice %18 {offsets = [0, 24], sizes = [8, 8], strides = [1, 1]} : vector<8x32xbf16> to vector<8x8xbf16>
    %85 = vector.extract_strided_slice %20 {offsets = [0, 24], sizes = [8, 8], strides = [1, 1]} : vector<8x32xbf16> to vector<8x8xbf16>
    %86 = vector.extract_strided_slice %22 {offsets = [0, 24], sizes = [8, 8], strides = [1, 1]} : vector<8x32xbf16> to vector<8x8xbf16>
    %cst_35 = arith.constant dense<0.000000e+00> : vector<8x8xf32>
    %87 = tpu.matmul %84, %85, %cst_35 {dimension_numbers = #tpu.dot_dimension_numbers<[1], [1], [0], [0], [0, 0, 1, 0], [], []>} : vector<8x8xbf16>, vector<8x8xbf16>, vector<8x8xf32> -> vector<8x8xf32>
    %cst_36 = arith.constant dense<0xFF800000> : vector<8xf32>
    %88 = vector.multi_reduction <maximumf>, %87, %cst_36 [1] : vector<8x8xf32> to vector<8xf32>
    %89 = vector.shape_cast %88 : vector<8xf32> to vector<8x1xf32>
    %90 = vector.broadcast %89 : vector<8x1xf32> to vector<8x8xf32>
    %91 = arith.subf %87, %90 : vector<8x8xf32>
    %92 = math.exp %91 : vector<8x8xf32>
    %cst_37 = arith.constant dense<0.000000e+00> : vector<8xf32>
    %93 = vector.multi_reduction <add>, %92, %cst_37 [1] : vector<8x8xf32> to vector<8xf32>
    %94 = vector.shape_cast %93 : vector<8xf32> to vector<8x1xf32>
    %95 = tpu.reciprocal %94 {approx = true} : vector<8x1xf32> -> vector<8x1xf32>
    %96 = vector.broadcast %95 : vector<8x1xf32> to vector<8x8xf32>
    %97 = arith.mulf %92, %96 : vector<8x8xf32>
    %98 = arith.truncf %97 : vector<8x8xf32> to vector<8x8xbf16>
    %cst_38 = arith.constant dense<0.000000e+00> : vector<8x8xf32>
    %99 = tpu.matmul %98, %86, %cst_38 {dimension_numbers = #tpu.dot_dimension_numbers<[1], [0], [0], [1], [0, 0, 1, 1], [], []>} : vector<8x8xbf16>, vector<8x8xbf16>, vector<8x8xf32> -> vector<8x8xf32>
    %100 = arith.truncf %99 : vector<8x8xf32> to vector<8x8xbf16>
    %c24 = arith.constant 24 : index
    %c0_39 = arith.constant 0 : index
    %101 = vector.load %arg8[%c24, %c0_39] : memref<32x32xbf16, #tpu.memory_space<vmem>>, vector<8x32xbf16>
    %cst_40 = arith.constant dense<0.000000e+00> : vector<8x32xf32>
    %102 = tpu.matmul %100, %101, %cst_40 {dimension_numbers = #tpu.dot_dimension_numbers<[1], [0], [0], [1], [0, 0, 1, 1], [], []>} : vector<8x8xbf16>, vector<8x32xbf16>, vector<8x32xf32> -> vector<8x32xf32>
    %103 = arith.addf %83, %102 : vector<8x32xf32>
    %c0_41 = arith.constant 0 : index
    %c0_42 = arith.constant 0 : index
    %104 = vector.load %arg9[%c0_41, %c0_42] : memref<1x32xf32, #tpu.memory_space<vmem>>, vector<1x32xf32>
    %105 = vector.broadcast %104 : vector<1x32xf32> to vector<8x32xf32>
    %106 = arith.addf %103, %105 : vector<8x32xf32>
    %107 = arith.addf %106, %1 : vector<8x32xf32>
    %cst_43 = arith.constant dense<0.000000e+00> : vector<8xf32>
    %108 = vector.multi_reduction <add>, %107, %cst_43 [1] : vector<8x32xf32> to vector<8xf32>
    %109 = vector.shape_cast %108 : vector<8xf32> to vector<8x1xf32>
    %cst_44 = arith.constant 3.200000e+01 : f32
    %110 = vector.broadcast %cst_44 : f32 to vector<8x1xf32>
    %111 = arith.divf %109, %110 : vector<8x1xf32>
    %112 = vector.broadcast %111 : vector<8x1xf32> to vector<8x32xf32>
    %113 = arith.subf %107, %112 : vector<8x32xf32>
    %114 = arith.mulf %113, %113 : vector<8x32xf32>
    %cst_45 = arith.constant dense<0.000000e+00> : vector<8xf32>
    %115 = vector.multi_reduction <add>, %114, %cst_45 [1] : vector<8x32xf32> to vector<8xf32>
    %116 = vector.shape_cast %115 : vector<8xf32> to vector<8x1xf32>
    %cst_46 = arith.constant 3.200000e+01 : f32
    %117 = vector.broadcast %cst_46 : f32 to vector<8x1xf32>
    %118 = arith.divf %116, %117 : vector<8x1xf32>
    %cst_47 = arith.constant 9.99999996E-13 : f32
    %119 = vector.broadcast %cst_47 : f32 to vector<8x1xf32>
    %120 = arith.addf %118, %119 : vector<8x1xf32>
    %121 = math.rsqrt %120 : vector<8x1xf32>
    %122 = vector.broadcast %121 : vector<8x1xf32> to vector<8x32xf32>
    %123 = arith.mulf %113, %122 : vector<8x32xf32>
    %c0_48 = arith.constant 0 : index
    %c0_49 = arith.constant 0 : index
    %124 = vector.load %arg10[%c0_48, %c0_49] : memref<1x32xf32, #tpu.memory_space<vmem>>, vector<1x32xf32>
    %125 = vector.broadcast %124 : vector<1x32xf32> to vector<8x32xf32>
    %126 = arith.mulf %123, %125 : vector<8x32xf32>
    %c0_50 = arith.constant 0 : index
    %c0_51 = arith.constant 0 : index
    %127 = vector.load %arg11[%c0_50, %c0_51] : memref<1x32xf32, #tpu.memory_space<vmem>>, vector<1x32xf32>
    %128 = vector.broadcast %127 : vector<1x32xf32> to vector<8x32xf32>
    %129 = arith.addf %126, %128 : vector<8x32xf32>
    %c0_52 = arith.constant 0 : index
    %c0_53 = arith.constant 0 : index
    %c0_54 = arith.constant 0 : index
    %130 = vector.load %arg12[%c0_52, %c0_53, %c0_54] : memref<1x8x32xf32, #tpu.memory_space<vmem>>, vector<1x8x32xf32>
    %131 = vector.shape_cast %130 : vector<1x8x32xf32> to vector<8x32xf32>
    %132 = vector.shape_cast %129 : vector<8x32xf32> to vector<1x8x32xf32>
    tpu.vector_store %arg12[%c0_52, %c0_53, %c0_54], %132 {strides = array<i32>} : memref<1x8x32xf32, #tpu.memory_space<vmem>>, vector<1x8x32xf32>,
    return
  }
  func.func @transform_0(%arg0: i32, %arg1: i32) -> (i32, i32, i32) {
    %c0_i32 = arith.constant 0 : i32
    %c0_i32_0 = arith.constant 0 : i32
    return %arg0, %arg1, %c0_i32 : i32, i32, i32
  }
  func.func @transform_1(%arg0: i32, %arg1: i32) -> (i32, i32, i32) {
    %c0_i32 = arith.constant 0 : i32
    %c0_i32_0 = arith.constant 0 : i32
    %c0_i32_1 = arith.constant 0 : i32
    return %arg0, %c0_i32, %c0_i32_0 : i32, i32, i32
  }
  func.func @transform_2(%arg0: i32, %arg1: i32) -> (i32, i32) {
    %c0_i32 = arith.constant 0 : i32
    %c0_i32_0 = arith.constant 0 : i32
    %c0_i32_1 = arith.constant 0 : i32
    return %c0_i32, %c0_i32_0 : i32, i32
  }
  func.func @transform_3(%arg0: i32, %arg1: i32) -> (i32, i32) {
    %c0_i32 = arith.constant 0 : i32
    %c0_i32_0 = arith.constant 0 : i32
    %c0_i32_1 = arith.constant 0 : i32
    return %c0_i32, %c0_i32_0 : i32, i32
  }
  func.func @transform_4(%arg0: i32, %arg1: i32) -> (i32, i32) {
    %c0_i32 = arith.constant 0 : i32
    %c0_i32_0 = arith.constant 0 : i32
    %c0_i32_1 = arith.constant 0 : i32
    return %c0_i32, %c0_i32_0 : i32, i32
  }
  func.func @transform_5(%arg0: i32, %arg1: i32) -> (i32, i32) {
    %c0_i32 = arith.constant 0 : i32
    %c0_i32_0 = arith.constant 0 : i32
    %c0_i32_1 = arith.constant 0 : i32
    return %c0_i32, %c0_i32_0 : i32, i32
  }
  func.func @transform_6(%arg0: i32, %arg1: i32) -> (i32, i32) {
    %c0_i32 = arith.constant 0 : i32
    %c0_i32_0 = arith.constant 0 : i32
    %c0_i32_1 = arith.constant 0 : i32
    return %c0_i32, %c0_i32_0 : i32, i32
  }
  func.func @transform_7(%arg0: i32, %arg1: i32) -> (i32, i32) {
    %c0_i32 = arith.constant 0 : i32
    %c0_i32_0 = arith.constant 0 : i32
    %c0_i32_1 = arith.constant 0 : i32
    return %c0_i32, %c0_i32_0 : i32, i32
  }
  func.func @transform_8(%arg0: i32, %arg1: i32) -> (i32, i32) {
    %c0_i32 = arith.constant 0 : i32
    %c0_i32_0 = arith.constant 0 : i32
    %c0_i32_1 = arith.constant 0 : i32
    return %c0_i32, %c0_i32_0 : i32, i32
  }
  func.func @transform_9(%arg0: i32, %arg1: i32) -> (i32, i32) {
    %c0_i32 = arith.constant 0 : i32
    %c0_i32_0 = arith.constant 0 : i32
    %c0_i32_1 = arith.constant 0 : i32
    return %c0_i32, %c0_i32_0 : i32, i32
  }
  func.func @transform_10(%arg0: i32, %arg1: i32) -> (i32, i32, i32) {
    %c0_i32 = arith.constant 0 : i32
    %c0_i32_0 = arith.constant 0 : i32
    return %arg0, %arg1, %c0_i32 : i32, i32, i32
  }
}

</mosaic_0001>

<llo_original>
// kernel: tpu_custom_call.1
$region0: #{tpu_custom_call.1}
  #allocation0 [shape = 'u32[]', space=smem, size = 0x4, offset = 0x4, fixed_abs, tag = 'smem constant byte address 0x4 - core index']
  #allocation1 [shape = 'u32[144,128]{1,0:T(1,128)}', space=vmem, size = 0x12000, scoped, tag = 'internal scratch']
  %s0 = inlined_call_operand.hbm [shape: f32[2,8,32], index: 0, kind: input, shape index: {}]
  %s1 = inlined_call_operand.hbm [shape: f32[2,8,32], index: 1, kind: input, shape index: {}]
  %s2 = inlined_call_operand.hbm [shape: bf16[32,32], index: 2, kind: input, shape index: {}]
  %s3 = inlined_call_operand.vmem [shape: f32[1,32], index: 3, kind: input, shape index: {}]
  %s4 = inlined_call_operand.hbm [shape: bf16[32,64], index: 4, kind: input, shape index: {}]
  %s5 = inlined_call_operand.vmem [shape: f32[1,64], index: 5, kind: input, shape index: {}]
  %s6 = inlined_call_operand.vmem [shape: bf16[32,32], index: 6, kind: input, shape index: {}]
  %s7 = inlined_call_operand.vmem [shape: f32[1,32], index: 7, kind: input, shape index: {}]
  %s8 = inlined_call_operand.vmem [shape: f32[1,32], index: 8, kind: input, shape index: {}]
  %s9 = inlined_call_operand.vmem [shape: f32[1,32], index: 9, kind: input, shape index: {}]
  %s10 = inlined_call_operand.hbm [shape: f32[2,8,32], index: 10, kind: output, shape index: {}]
  %s11 = sld [smem:[#allocation0]]
  $region89: #{tpu_custom_call.1} parent=0
    _
  %s13 = ssub.s32 1, %s11
  %s14 = scalar_select 0, %s13, %s11
  $region1: #{tpu_custom_call.1} parent=0
    #allocation2 [shape = 'u8[8192]{0}', space=vmem, size = 0x2000, scoped, tag = 'input window, operand 0']
    #allocation3 [shape = 's32[2]{0}', space=sflag, size = 0x8, scoped, tag = 'scoped memory for tpu_custom_call.1']
    #allocation4 [shape = 's32[2]{0}', space=sflag, size = 0x8, scoped, tag = 'scoped memory for tpu_custom_call.1']
    #allocation5 [shape = 'u8[8192]{0}', space=vmem, size = 0x2000, scoped, tag = 'input window, operand 1']
    #allocation6 [shape = 's32[2]{0}', space=sflag, size = 0x8, scoped, tag = 'scoped memory for tpu_custom_call.1']
    #allocation7 [shape = 'u8[8192]{0}', space=vmem, size = 0x2000, scoped, tag = 'input window, operand 2, single buffered']
    #allocation8 [shape = 'u8[8192]{0}', space=vmem, size = 0x2000, scoped, tag = 'input window, operand 4, single buffered']
    #allocation9 [shape = 's32[1]{0}', space=sflag, size = 0x4, scoped, tag = 'scoped memory for tpu_custom_call.1']
    #allocation10 [shape = 'u8[8192]{0}', space=vmem, size = 0x2000, scoped, tag = 'output window, operand 0']
    %15 = vsyncpa [#allocation3], 0
    %s16 = scalar_lea.sflag [#allocation3], 1
    %17 = vsyncpa %s16, 0
    %18 = vsyncpa [#allocation6], 0
    %s19 = scalar_lea.sflag [#allocation6], 1
    %20 = vsyncpa %s19, 0
    %21 = vsyncpa [#allocation9], 0
    %22 = vsyncpa [#allocation4], 0
    %s23 = scalar_lea.sflag [#allocation4], 1
    %24 = vsyncpa %s23, 0
    loop: start=0, step=1, limit=4
    $region2: #{tpu_custom_call.1} parent=1 // loop_pre_header
      _
    $region3: #{tpu_custom_call.1} parent=1 // loop_header
      %s26 = sphi 0, %s30
      %p27 = scmp.ge.s32.totalorder %s26, 4
      %s33 = sphi 0, %s45
      %s34 = sphi 0, %s41
      %s35 = sphi 0, %s33
      %s36 = sphi 0, %s34
      %s37 = sphi 0, %s35
      %s38 = sphi 0, %s36
      %s50 = sphi 0, %s52
      %s53 = sphi 0, %s50
      %s54 = sphi 0, %s53
      %s70 = sphi 0, %s54
      %s76 = sphi 0, %s78
      %s79 = sphi 0, %s76
      %s80 = sphi 0, %s79
      %s96 = sphi 0, %s80
      %s100 = sphi 0, %s100
      %s102 = sphi 0, %s100
      %s103 = sphi 0, %s102
      %s117 = sphi 0, %s103
      %s121 = sphi 0, %s121
      %s123 = sphi 0, %s121
      %s124 = sphi 0, %s123
      %s138 = sphi 0, %s124
      %s142 = sphi 0, %s142
      %s144 = sphi 0, %s142
      %s145 = sphi 0, %s144
      %s159 = sphi 0, %s145
      %s163 = sphi 0, %s163
      %s165 = sphi 0, %s163
      %s166 = sphi 0, %s165
      %s180 = sphi 0, %s166
      %s184 = sphi 0, %s184
      %s186 = sphi 0, %s184
      %s187 = sphi 0, %s186
      %s201 = sphi 0, %s187
      %s205 = sphi 0, %s205
      %s207 = sphi 0, %s205
      %s208 = sphi 0, %s207
      %s222 = sphi 0, %s208
      %s226 = sphi 0, %s226
      %s228 = sphi 0, %s226
      %s229 = sphi 0, %s228
      %s243 = sphi 0, %s229
      %s247 = sphi 0, %s247
      %s249 = sphi 0, %s247
      %s250 = sphi 0, %s249
      %s264 = sphi 0, %s250
      %s272 = sphi 0, %s274
      %s275 = sphi 0, %s272
      %s276 = sphi 0, %s275
      %s292 = sphi 0, %s276
    $region4: #{tpu_custom_call.1} parent=1 // loop_header_branch
      %29 = sbr.rel (%p27) target = $region8
    $region5: #{tpu_custom_call.1} parent=1 // loop_body
      %s31 = ssub.s32 %s26, 1
      %s32 = ssub.s32 %s26, 2
      %s39 = sadd.s32 1, %s34
      %p40 = scmp.ge.s32.totalorder %s39, 1
      %s41 = scalar_select %p40, 0, %s39
      %s42 = sadd.s32 1, %s33
      %s43 = scalar_select %p40, %s42, %s33
      %p44 = scmp.ge.s32.totalorder %s43, 2
      %s45 = scalar_select %p44, 0, %s43
      %s46 = ssub.s32 %s33, %s45
      %s47 = ssub.s32 %s34, %s41
      %s48 = sor.u32 %s46, %s47
      %p49 = scmp.eq.s32.totalorder %s48, 0
      %s51 = sadd.s32 %s50, 1
      %s52 = scalar_select %p49, %s50, %s51
      %p55 = pneg %p49
      %p56 = scmp.eq.s32.totalorder %s26, 1
      %p57 = por %p55, %p56
      %p58 = scmp.ne.s32.totalorder %s50, %s53
      %p59 = scmp.eq.s32.totalorder %s26, 0
      %p60 = por %p58, %p59
      %p61 = scmp.ne.s32.totalorder %s50, %s53
      %p62 = scmp.eq.s32.totalorder %s31, 1
      %p63 = por %p61, %p62
      %p64 = scmp.ne.s32.totalorder %s53, %s54
      %p65 = scmp.eq.s32.totalorder %s31, 0
      %p66 = por %p64, %p65
      %p67 = scmp.ne.s32.totalorder %s53, %s54
      %p68 = scmp.eq.s32.totalorder %s32, 1
      %p69 = por %p67, %p68
      %p71 = scmp.ne.s32.totalorder %s54, %s70
      %p72 = scmp.eq.s32.totalorder %s32, 0
      %p73 = por %p71, %p72
      %s74 = ssub.s32 %s33, %s45
      %p75 = scmp.eq.s32.totalorder %s74, 0
      %s77 = sadd.s32 %s76, 1
      %s78 = scalar_select %p75, %s76, %s77
      %p81 = pneg %p75
      %p82 = scmp.eq.s32.totalorder %s26, 1
      %p83 = por %p81, %p82
      %p84 = scmp.ne.s32.totalorder %s76, %s79
      %p85 = scmp.eq.s32.totalorder %s26, 0
      %p86 = por %p84, %p85
      %p87 = scmp.ne.s32.totalorder %s76, %s79
      %p88 = scmp.eq.s32.totalorder %s31, 1
      %p89 = por %p87, %p88
      %p90 = scmp.ne.s32.totalorder %s79, %s80
      %p91 = scmp.eq.s32.totalorder %s31, 0
      %p92 = por %p90, %p91
      %p93 = scmp.ne.s32.totalorder %s79, %s80
      %p94 = scmp.eq.s32.totalorder %s32, 1
      %p95 = por %p93, %p94
      %p97 = scmp.ne.s32.totalorder %s80, %s96
      %p98 = scmp.eq.s32.totalorder %s32, 0
      %p99 = por %p97, %p98
      %s101 = sadd.s32 %s100, 1
      %p104 = scmp.eq.s32.totalorder %s26, 1
      %p105 = scmp.ne.s32.totalorder %s100, %s102
      %p106 = scmp.eq.s32.totalorder %s26, 0
      %p107 = por %p105, %p106
      %p108 = scmp.ne.s32.totalorder %s100, %s102
      %p109 = scmp.eq.s32.totalorder %s31, 1
      %p110 = por %p108, %p109
      %p111 = scmp.ne.s32.totalorder %s102, %s103
      %p112 = scmp.eq.s32.totalorder %s31, 0
      %p113 = por %p111, %p112
      %p114 = scmp.ne.s32.totalorder %s102, %s103
      %p115 = scmp.eq.s32.totalorder %s32, 1
      %p116 = por %p114, %p115
      %p118 = scmp.ne.s32.totalorder %s103, %s117
      %p119 = scmp.eq.s32.totalorder %s32, 0
      %p120 = por %p118, %p119
      %s122 = sadd.s32 %s121, 1
      %p125 = scmp.eq.s32.totalorder %s26, 1
      %p126 = scmp.ne.s32.totalorder %s121, %s123
      %p127 = scmp.eq.s32.totalorder %s26, 0
      %p128 = por %p126, %p127
      %p129 = scmp.ne.s32.totalorder %s121, %s123
      %p130 = scmp.eq.s32.totalorder %s31, 1
      %p131 = por %p129, %p130
      %p132 = scmp.ne.s32.totalorder %s123, %s124
      %p133 = scmp.eq.s32.totalorder %s31, 0
      %p134 = por %p132, %p133
      %p135 = scmp.ne.s32.totalorder %s123, %s124
      %p136 = scmp.eq.s32.totalorder %s32, 1
      %p137 = por %p135, %p136
      %p139 = scmp.ne.s32.totalorder %s124, %s138
      %p140 = scmp.eq.s32.totalorder %s32, 0
      %p141 = por %p139, %p140
      %s143 = sadd.s32 %s142, 1
      %p146 = scmp.eq.s32.totalorder %s26, 1
      %p147 = scmp.ne.s32.totalorder %s142, %s144
      %p148 = scmp.eq.s32.totalorder %s26, 0
      %p149 = por %p147, %p148
      %p150 = scmp.ne.s32.totalorder %s142, %s144
      %p151 = scmp.eq.s32.totalorder %s31, 1
      %p152 = por %p150, %p151
      %p153 = scmp.ne.s32.totalorder %s144, %s145
      %p154 = scmp.eq.s32.totalorder %s31, 0
      %p155 = por %p153, %p154
      %p156 = scmp.ne.s32.totalorder %s144, %s145
      %p157 = scmp.eq.s32.totalorder %s32, 1
      %p158 = por %p156, %p157
      %p160 = scmp.ne.s32.totalorder %s145, %s159
      %p161 = scmp.eq.s32.totalorder %s32, 0
      %p162 = por %p160, %p161
      %s164 = sadd.s32 %s163, 1
      %p167 = scmp.eq.s32.totalorder %s26, 1
      %p168 = scmp.ne.s32.totalorder %s163, %s165
      %p169 = scmp.eq.s32.totalorder %s26, 0
      %p170 = por %p168, %p169
      %p171 = scmp.ne.s32.totalorder %s163, %s165
      %p172 = scmp.eq.s32.totalorder %s31, 1
      %p173 = por %p171, %p172
      %p174 = scmp.ne.s32.totalorder %s165, %s166
      %p175 = scmp.eq.s32.totalorder %s31, 0
      %p176 = por %p174, %p175
      %p177 = scmp.ne.s32.totalorder %s165, %s166
      %p178 = scmp.eq.s32.totalorder %s32, 1
      %p179 = por %p177, %p178
      %p181 = scmp.ne.s32.totalorder %s166, %s180
      %p182 = scmp.eq.s32.totalorder %s32, 0
      %p183 = por %p181, %p182
      %s185 = sadd.s32 %s184, 1
      %p188 = scmp.eq.s32.totalorder %s26, 1
      %p189 = scmp.ne.s32.totalorder %s184, %s186
      %p190 = scmp.eq.s32.totalorder %s26, 0
      %p191 = por %p189, %p190
      %p192 = scmp.ne.s32.totalorder %s184, %s186
      %p193 = scmp.eq.s32.totalorder %s31, 1
      %p194 = por %p192, %p193
      %p195 = scmp.ne.s32.totalorder %s186, %s187
      %p196 = scmp.eq.s32.totalorder %s31, 0
      %p197 = por %p195, %p196
      %p198 = scmp.ne.s32.totalorder %s186, %s187
      %p199 = scmp.eq.s32.totalorder %s32, 1
      %p200 = por %p198, %p199
      %p202 = scmp.ne.s32.totalorder %s187, %s201
      %p203 = scmp.eq.s32.totalorder %s32, 0
      %p204 = por %p202, %p203
      %s206 = sadd.s32 %s205, 1
      %p209 = scmp.eq.s32.totalorder %s26, 1
      %p210 = scmp.ne.s32.totalorder %s205, %s207
      %p211 = scmp.eq.s32.totalorder %s26, 0
      %p212 = por %p210, %p211
      %p213 = scmp.ne.s32.totalorder %s205, %s207
      %p214 = scmp.eq.s32.totalorder %s31, 1
      %p215 = por %p213, %p214
      %p216 = scmp.ne.s32.totalorder %s207, %s208
      %p217 = scmp.eq.s32.totalorder %s31, 0
      %p218 = por %p216, %p217
      %p219 = scmp.ne.s32.totalorder %s207, %s208
      %p220 = scmp.eq.s32.totalorder %s32, 1
      %p221 = por %p219, %p220
      %p223 = scmp.ne.s32.totalorder %s208, %s222
      %p224 = scmp.eq.s32.totalorder %s32, 0
      %p225 = por %p223, %p224
      %s227 = sadd.s32 %s226, 1
      %p230 = scmp.eq.s32.totalorder %s26, 1
      %p231 = scmp.ne.s32.totalorder %s226, %s228
      %p232 = scmp.eq.s32.totalorder %s26, 0
      %p233 = por %p231, %p232
      %p234 = scmp.ne.s32.totalorder %s226, %s228
      %p235 = scmp.eq.s32.totalorder %s31, 1
      %p236 = por %p234, %p235
      %p237 = scmp.ne.s32.totalorder %s228, %s229
      %p238 = scmp.eq.s32.totalorder %s31, 0
      %p239 = por %p237, %p238
      %p240 = scmp.ne.s32.totalorder %s228, %s229
      %p241 = scmp.eq.s32.totalorder %s32, 1
      %p242 = por %p240, %p241
      %p244 = scmp.ne.s32.totalorder %s229, %s243
      %p245 = scmp.eq.s32.totalorder %s32, 0
      %p246 = por %p244, %p245
      %s248 = sadd.s32 %s247, 1
      %p251 = scmp.eq.s32.totalorder %s26, 1
      %p252 = scmp.ne.s32.totalorder %s247, %s249
      %p253 = scmp.eq.s32.totalorder %s26, 0
      %p254 = por %p252, %p253
      %p255 = scmp.ne.s32.totalorder %s247, %s249
      %p256 = scmp.eq.s32.totalorder %s31, 1
      %p257 = por %p255, %p256
      %p258 = scmp.ne.s32.totalorder %s249, %s250
      %p259 = scmp.eq.s32.totalorder %s31, 0
      %p260 = por %p258, %p259
      %p261 = scmp.ne.s32.totalorder %s249, %s250
      %p262 = scmp.eq.s32.totalorder %s32, 1
      %p263 = por %p261, %p262
      %p265 = scmp.ne.s32.totalorder %s250, %s264
      %p266 = scmp.eq.s32.totalorder %s32, 0
      %p267 = por %p265, %p266
      %s268 = ssub.s32 %s33, %s45
      %s269 = ssub.s32 %s34, %s41
      %s270 = sor.u32 %s268, %s269
      %p271 = scmp.eq.s32.totalorder %s270, 0
      %s273 = sadd.s32 %s272, 1
      %s274 = scalar_select %p271, %s272, %s273
      %p277 = pneg %p271
      %p278 = scmp.eq.s32.totalorder %s26, 1
      %p279 = por %p277, %p278
      %p280 = scmp.ne.s32.totalorder %s272, %s275
      %p281 = scmp.eq.s32.totalorder %s26, 0
      %p282 = por %p280, %p281
      %p283 = scmp.ne.s32.totalorder %s272, %s275
      %p284 = scmp.eq.s32.totalorder %s31, 1
      %p285 = por %p283, %p284
      %p286 = scmp.ne.s32.totalorder %s275, %s276
      %p287 = scmp.eq.s32.totalorder %s31, 0
      %p288 = por %p286, %p287
      %p289 = scmp.ne.s32.totalorder %s275, %s276
      %p290 = scmp.eq.s32.totalorder %s32, 1
      %p291 = por %p289, %p290
      %p293 = scmp.ne.s32.totalorder %s276, %s292
      %p294 = scmp.eq.s32.totalorder %s32, 0
      %p295 = por %p293, %p294
      %p296 = scmp.le.s32.totalorder 1, %s26
      %p297 = scmp.lt.s32.totalorder %s26, 3
      %p298 = pnand %p296, %p297
      %p299 = pneg %p298
      // Predicated region
      $region9: #{tpu_custom_call.1} parent=5 // pred_check
        _
      $region10: #{tpu_custom_call.1} parent=5 // pred_check_branch
        %301 = sbr.rel (%p298) target = $region12
      $region11: #{tpu_custom_call.1} parent=5 // pred_region
        %s302 = ssub.s32 %s26, 1
        // Predicated region
        $region13: #{tpu_custom_call.1} parent=11 // pred_check
          %p303 = pneg %p113
        $region14: #{tpu_custom_call.1} parent=11 // pred_check_branch
          %305 = sbr.rel (%p303) target = $region16
        $region15: #{tpu_custom_call.1} parent=11 // pred_region
          %s307 = ssub.s32 256, 256
          %308 = vsyncadd [#allocation6], %s307
          %s309 = sshll.u32 [#allocation7], 4
          %s310 = int_to_ptr.vmem [resolvable:$true] %s309
          %315 = dma.hbm_to_vmem [thread:$0]  %s2, 256, %s310, [#allocation6], 64, 64, 4
        $region16: #{tpu_custom_call.1} parent=11 // pred_fallthru
          _
        // Predicated region
        $region17: #{tpu_custom_call.1} parent=11 // pred_check
          %p316 = pneg %p134
        $region18: #{tpu_custom_call.1} parent=11 // pred_check_branch
          %318 = sbr.rel (%p316) target = $region20
        $region19: #{tpu_custom_call.1} parent=11 // pred_region
          _
        $region20: #{tpu_custom_call.1} parent=11 // pred_fallthru
          _
        // Predicated region
        $region21: #{tpu_custom_call.1} parent=11 // pred_check
          %p319 = pneg %p155
        $region22: #{tpu_custom_call.1} parent=11 // pred_check_branch
          %321 = sbr.rel (%p319) target = $region24
        $region23: #{tpu_custom_call.1} parent=11 // pred_region
          %s323 = ssub.s32 256, 256
          %324 = vsyncadd [#allocation9], %s323
          %s325 = sshll.u32 [#allocation8], 4
          %s326 = int_to_ptr.vmem [resolvable:$true] %s325
          %331 = dma.hbm_to_vmem [thread:$0]  %s4, 256, %s326, [#allocation9], 64, 64, 4
        $region24: #{tpu_custom_call.1} parent=11 // pred_fallthru
          _
        // Predicated region
        $region25: #{tpu_custom_call.1} parent=11 // pred_check
          %p332 = pneg %p176
        $region26: #{tpu_custom_call.1} parent=11 // pred_check_branch
          %334 = sbr.rel (%p332) target = $region28
        $region27: #{tpu_custom_call.1} parent=11 // pred_region
          _
        $region28: #{tpu_custom_call.1} parent=11 // pred_fallthru
          _
        // Predicated region
        $region29: #{tpu_custom_call.1} parent=11 // pred_check
          %p335 = pneg %p197
        $region30: #{tpu_custom_call.1} parent=11 // pred_check_branch
          %337 = sbr.rel (%p335) target = $region32
        $region31: #{tpu_custom_call.1} parent=11 // pred_region
          _
        $region32: #{tpu_custom_call.1} parent=11 // pred_fallthru
          _
        // Predicated region
        $region33: #{tpu_custom_call.1} parent=11 // pred_check
          %p338 = pneg %p218
        $region34: #{tpu_custom_call.1} parent=11 // pred_check_branch
          %340 = sbr.rel (%p338) target = $region36
        $region35: #{tpu_custom_call.1} parent=11 // pred_region
          _
        $region36: #{tpu_custom_call.1} parent=11 // pred_fallthru
          _
        // Predicated region
        $region37: #{tpu_custom_call.1} parent=11 // pred_check
          %p341 = pneg %p239
        $region38: #{tpu_custom_call.1} parent=11 // pred_check_branch
          %343 = sbr.rel (%p341) target = $region40
        $region39: #{tpu_custom_call.1} parent=11 // pred_region
          _
        $region40: #{tpu_custom_call.1} parent=11 // pred_fallthru
          _
        // Predicated region
        $region41: #{tpu_custom_call.1} parent=11 // pred_check
          %p344 = pneg %p260
        $region42: #{tpu_custom_call.1} parent=11 // pred_check_branch
          %346 = sbr.rel (%p344) target = $region44
        $region43: #{tpu_custom_call.1} parent=11 // pred_region
          _
        $region44: #{tpu_custom_call.1} parent=11 // pred_fallthru
          _
      $region12: #{tpu_custom_call.1} parent=5 // pred_fallthru
        _
      %p347 = scmp.lt.s32.totalorder %s26, 2
      // Predicated region
      $region45: #{tpu_custom_call.1} parent=5 // pred_check
        %p348 = pneg %p347
      $region46: #{tpu_custom_call.1} parent=5 // pred_check_branch
        %350 = sbr.rel (%p348) target = $region48
      $region47: #{tpu_custom_call.1} parent=5 // pred_region
        // Predicated region
        $region49: #{tpu_custom_call.1} parent=47 // pred_check
          %p351 = pneg %p60
        $region50: #{tpu_custom_call.1} parent=47 // pred_check_branch
          %353 = sbr.rel (%p351) target = $region52
        $region51: #{tpu_custom_call.1} parent=47 // pred_region
          %s354 = sand.u32 %s50, 1
          %s355 = scalar_lea.sflag [#allocation3], %s354
          %s356 = sand.u32 %s50, 1
          %s357 = smul.addr %s356, 8
          %s358 = scalar_lea.vmem [#allocation2], %s357
          %s360 = ssub.s32 128, 128
          %361 = vsyncadd %s355, %s360
          %s362 = sadd.s32 %s34, %s33
          %s363 = smul.addr %s362, 128
          %s364 = scalar_lea.hbm %s0, %s363
          %s366 = sshll.u32 %s358, 4
          %s367 = int_to_ptr.vmem [resolvable:$true] %s366
          %369 = dma.hbm_to_vmem [thread:$0]  %s364, 128, %s367, %s355
        $region52: #{tpu_custom_call.1} parent=47 // pred_fallthru
          _
        // Predicated region
        $region53: #{tpu_custom_call.1} parent=47 // pred_check
          %p370 = pneg %p86
        $region54: #{tpu_custom_call.1} parent=47 // pred_check_branch
          %372 = sbr.rel (%p370) target = $region56
        $region55: #{tpu_custom_call.1} parent=47 // pred_region
          %s373 = sand.u32 %s26, 1
          %s374 = scalar_lea.sflag [#allocation6], %s373
          %s375 = sand.u32 %s76, 1
          %s376 = smul.addr %s375, 8
          %s377 = scalar_lea.vmem [#allocation5], %s376
          %s379 = ssub.s32 128, 128
          %380 = vsyncadd %s374, %s379
          %s381 = smul.addr %s33, 128
          %s382 = scalar_lea.hbm %s1, %s381
          %s384 = sshll.u32 %s377, 4
          %s385 = int_to_ptr.vmem [resolvable:$true] %s384
          %387 = dma.hbm_to_vmem [thread:$0]  %s382, 128, %s385, %s374
        $region56: #{tpu_custom_call.1} parent=47 // pred_fallthru
          _
      $region48: #{tpu_custom_call.1} parent=5 // pred_fallthru
        _
      %p388 = scmp.le.s32.totalorder 1, %s26
      %p389 = scmp.lt.s32.totalorder %s26, 3
      %p390 = pnand %p388, %p389
      %p391 = pneg %p390
      // Predicated region
      $region57: #{tpu_custom_call.1} parent=5 // pred_check
        _
      $region58: #{tpu_custom_call.1} parent=5 // pred_check_branch
        %393 = sbr.rel (%p390) target = $region60
      $region59: #{tpu_custom_call.1} parent=5 // pred_region
        %s394 = ssub.s32 %s26, 1
        %s395 = sand.u32 %s53, 1
        %s396 = scalar_lea.sflag [#allocation3], %s395
        %s397 = sand.u32 %s53, 1
        %s398 = smul.addr %s397, 8
        %s399 = scalar_lea.vmem [#allocation2], %s398
        // Predicated region
        $region61: #{tpu_custom_call.1} parent=59 // pred_check
          %p400 = pneg %p66
        $region62: #{tpu_custom_call.1} parent=59 // pred_check_branch
          %402 = sbr.rel (%p400) target = $region64
        $region63: #{tpu_custom_call.1} parent=59 // pred_region
          %403 = dma.done %s396, 128
        $region64: #{tpu_custom_call.1} parent=59 // pred_fallthru
          _
        %s404 = sand.u32 %s31, 1
        %s405 = scalar_lea.sflag [#allocation6], %s404
        %s406 = sand.u32 %s79, 1
        %s407 = smul.addr %s406, 8
        %s408 = scalar_lea.vmem [#allocation5], %s407
        // Predicated region
        $region65: #{tpu_custom_call.1} parent=59 // pred_check
          %p409 = pneg %p92
        $region66: #{tpu_custom_call.1} parent=59 // pred_check_branch
          %411 = sbr.rel (%p409) target = $region68
        $region67: #{tpu_custom_call.1} parent=59 // pred_region
          %412 = dma.done %s405, 128
        $region68: #{tpu_custom_call.1} parent=59 // pred_fallthru
          _
        // Predicated region
        $region69: #{tpu_custom_call.1} parent=59 // pred_check
          %p413 = pneg %p113
        $region70: #{tpu_custom_call.1} parent=59 // pred_check_branch
          %415 = sbr.rel (%p413) target = $region72
        $region71: #{tpu_custom_call.1} parent=59 // pred_region
          %416 = dma.done [#allocation6], 256
        $region72: #{tpu_custom_call.1} parent=59 // pred_fallthru
          _
        // Predicated region
        $region73: #{tpu_custom_call.1} parent=59 // pred_check
          %p417 = pneg %p155
        $region74: #{tpu_custom_call.1} parent=59 // pred_check_branch
          %419 = sbr.rel (%p417) target = $region76
        $region75: #{tpu_custom_call.1} parent=59 // pred_region
          %420 = dma.done [#allocation9], 256
        $region76: #{tpu_custom_call.1} parent=59 // pred_fallthru
          _
        %s421 = sand.u32 %s53, 1
        %s422 = scalar_lea.sflag [#allocation3], %s421
        %s423 = sand.u32 %s53, 1
        %s424 = smul.addr %s423, 8
        %s425 = scalar_lea.vmem [#allocation2], %s424
        %p426 = pneg %p66
        %p427 = pneg %p63
        %s428 = sand.u32 %s31, 1
        %s429 = scalar_lea.sflag [#allocation6], %s428
        %s430 = sand.u32 %s79, 1
        %s431 = smul.addr %s430, 8
        %s432 = scalar_lea.vmem [#allocation5], %s431
        %p433 = pneg %p92
        %p434 = pneg %p89
        %p435 = pneg %p113
        %p436 = pneg %p110
        %p437 = pneg %p134
        %p438 = pneg %p131
        %p439 = pneg %p155
        %p440 = pneg %p152
        %p441 = pneg %p176
        %p442 = pneg %p173
        %p443 = pneg %p197
        %p444 = pneg %p194
        %p445 = pneg %p218
        %p446 = pneg %p215
        %p447 = pneg %p239
        %p448 = pneg %p236
        %p449 = pneg %p260
        %p450 = pneg %p257
        %p451 = pneg %p288
        %p452 = pneg %p285
        %s453 = sand.u32 %s275, 1
        %s454 = scalar_lea.sflag [#allocation4], %s453
        %s455 = sand.u32 %s275, 1
        %s456 = smul.addr %s455, 8
        %s457 = scalar_lea.vmem [#allocation10], %s456
        %v459 = vld [vmem:[%s399] sm:$0xff]
        %v460 = vpack.c.bf16 %v459, %v459
        %v461 = vld [vmem:[%s408] sm:$0xff]
        %v462 = vpack.c.bf16 %v461, %v461
        %v463 = vld [vmem:[#allocation7] sm:$0xf]
        %v464 = vld [vmem:[#allocation7 + $0x4] sm:$0xf]
        %v465 = vld [vmem:[#allocation7 + $0x8] sm:$0xf]
        %v466 = vld [vmem:[#allocation7 + $0xc] sm:$0xf]
        %v467 = vld [vmem:[%s3] sm:$0x1]
        %v469 = vlaneseq
        %v470 = vshrl.u32 %v469, 7
        %v471 = vsub.s32 0, %v470
        %v472 = vrot.slane %v467, %v471
        %v478 = vunpack.c.l.b16 %v463
        %v479 = vunpack.c.l.b16 %v464
        %v480 = vunpack.c.l.b16 %v465
        %v481 = vunpack.c.l.b16 %v466
        %v482 = vpack.c.b16 %v479, %v478
        %v483 = vpack.c.b16 %v481, %v480
        %vm486 = vcmask 261120
        %v488 = vsel %vm486, %v460, 0
        %490 = vmatprep.subr.bf16.mxu0 0
        %491 = vmatpush1.bf16.msra.mxu0 %v482
        %492 = vmatprep.subr.bf16.mxu0 0
        %493 = vmatpush1.bf16.msra.mxu0 %v483
        %494 = vmatprep.subr.bf16.mxu0 0
        %495 = vmatpush1.bf16.msra.mxu0 0
        %496 = vmatprep.subr.bf16.mxu0 0
        %497 = vmatpush1.bf16.msra.mxu0 0
        %498 = vmatprep.subr.bf16.mxu0 0
        %499 = vmatpush1.bf16.msra.mxu0 0
        %500 = vmatprep.subr.bf16.mxu0 0
        %501 = vmatpush1.bf16.msra.mxu0 0
        %502 = vmatprep.subr.bf16.mxu0 0
        %503 = vmatpush1.bf16.msra.mxu0 0
        %504 = vmatprep.subr.bf16.mxu0 0
        %505 = vmatpush1.bf16.msra.mxu0 0
        %506 = vmatprep.subr.bf16.mxu0 0
        %507 = vmatpush1.bf16.msra.mxu0 0
        %508 = vmatprep.subr.bf16.mxu0 0
        %509 = vmatpush1.bf16.msra.mxu0 0
        %510 = vmatprep.subr.bf16.mxu0 0
        %511 = vmatpush1.bf16.msra.mxu0 0
        %512 = vmatprep.subr.bf16.mxu0 0
        %513 = vmatpush1.bf16.msra.mxu0 0
        %514 = vmatprep.subr.bf16.mxu0 0
        %515 = vmatpush1.bf16.msra.mxu0 0
        %516 = vmatprep.subr.bf16.mxu0 0
        %517 = vmatpush1.bf16.msra.mxu0 0
        %518 = vmatprep.subr.bf16.mxu0 0
        %519 = vmatpush1.bf16.msra.mxu0 0
        %520 = vmatprep.subr.bf16.mxu0 0
        %521 = vmatpush1.bf16.msra.mxu0 0
        %522 = vmatprep.mubr.bf16.mxu0 0
        %523 = vmatmul.mubr.bf16.gmra.mrb[0].mxu0 %v488
        %v524 = vpop.f32.mrb[0].mxu0
        %v525 = vadd.f32 %v472, %v524
        %v526 = vpop.f32.mrb[0].mxu0
        %v527 = vpop.f32.mrb[0].mxu0
        %v528 = vpop.f32.mrb[0].mxu0
        %529 = vdwg.mxu0
        %v530 = vld [vmem:[#allocation8] sm:$0xf]
        %v531 = vld [vmem:[#allocation8 + $0x4] sm:$0xf]
        %v532 = vld [vmem:[#allocation8 + $0x8] sm:$0xf]
        %v533 = vld [vmem:[#allocation8 + $0xc] sm:$0xf]
        %v534 = vld [vmem:[%s5] sm:$0x1]
        %v536 = vlaneseq
        %v537 = vshrl.u32 %v536, 7
        %v538 = vsub.s32 0, %v537
        %v539 = vrot.slane %v534, %v538
        %v545 = vunpack.c.l.b16 %v530
        %v546 = vunpack.c.l.b16 %v531
        %v547 = vunpack.c.l.b16 %v532
        %v548 = vunpack.c.l.b16 %v533
        %v549 = vpack.c.b16 %v546, %v545
        %v550 = vpack.c.b16 %v548, %v547
        %v554 = vsel %vm486, %v462, 0
        %556 = vmatprep.subr.bf16.mxu0 0
        %557 = vmatpush1.bf16.msra.mxu0 %v549
        %558 = vmatprep.subr.bf16.mxu0 0
        %559 = vmatpush1.bf16.msra.mxu0 %v550
        %560 = vmatprep.subr.bf16.mxu0 0
        %561 = vmatpush1.bf16.msra.mxu0 0
        %562 = vmatprep.subr.bf16.mxu0 0
        %563 = vmatpush1.bf16.msra.mxu0 0
        %564 = vmatprep.subr.bf16.mxu0 0
        %565 = vmatpush1.bf16.msra.mxu0 0
        %566 = vmatprep.subr.bf16.mxu0 0
        %567 = vmatpush1.bf16.msra.mxu0 0
        %568 = vmatprep.subr.bf16.mxu0 0
        %569 = vmatpush1.bf16.msra.mxu0 0
        %570 = vmatprep.subr.bf16.mxu0 0
        %571 = vmatpush1.bf16.msra.mxu0 0
        %572 = vmatprep.subr.bf16.mxu0 0
        %573 = vmatpush1.bf16.msra.mxu0 0
        %574 = vmatprep.subr.bf16.mxu0 0
        %575 = vmatpush1.bf16.msra.mxu0 0
        %576 = vmatprep.subr.bf16.mxu0 0
        %577 = vmatpush1.bf16.msra.mxu0 0
        %578 = vmatprep.subr.bf16.mxu0 0
        %579 = vmatpush1.bf16.msra.mxu0 0
        %580 = vmatprep.subr.bf16.mxu0 0
        %581 = vmatpush1.bf16.msra.mxu0 0
        %582 = vmatprep.subr.bf16.mxu0 0
        %583 = vmatpush1.bf16.msra.mxu0 0
        %584 = vmatprep.subr.bf16.mxu0 0
        %585 = vmatpush1.bf16.msra.mxu0 0
        %586 = vmatprep.subr.bf16.mxu0 0
        %587 = vmatpush1.bf16.msra.mxu0 0
        %588 = vmatprep.mubr.bf16.mxu0 0
        %589 = vmatmul.mubr.bf16.gmra.mrb[0].mxu0 %v554
        %v590 = vpop.f32.mrb[0].mxu0
        %v591 = vadd.f32 %v539, %v590
        %v592 = vpop.f32.mrb[0].mxu0
        %v593 = vpop.f32.mrb[0].mxu0
        %v594 = vpop.f32.mrb[0].mxu0
        %595 = vdwg.mxu0
        %v596 = vmul.f32 %v525, 0.35355338
        %v597 = vpack.c.bf16 %v596, %v596
        %v598 = vpack.c.bf16 %v591, %v591
        %vm599 = vcmask 64512
        %v601 = vsel %vm599, %v597, 0
        %v604 = vsel %vm599, %v598, 0
        %606 = vmatprep.subr.bf16.mxu0 0
        %607 = vmatpush1.bf16.xpose.msra.mxu0 %v604
        %608 = vmatprep.subr.bf16.mxu0 0
        %609 = vmatpush1.bf16.xpose.msra.mxu0 0
        %610 = vmatprep.subr.bf16.mxu0 0
        %611 = vmatpush1.bf16.xpose.msra.mxu0 0
        %612 = vmatprep.subr.bf16.mxu0 0
        %613 = vmatpush1.bf16.xpose.msra.mxu0 0
        %614 = vmatprep.subr.bf16.mxu0 0
        %615 = vmatpush1.bf16.xpose.msra.mxu0 0
        %616 = vmatprep.subr.bf16.mxu0 0
        %617 = vmatpush1.bf16.xpose.msra.mxu0 0
        %618 = vmatprep.subr.bf16.mxu0 0
        %619 = vmatpush1.bf16.xpose.msra.mxu0 0
        %620 = vmatprep.subr.bf16.mxu0 0
        %621 = vmatpush1.bf16.xpose.msra.mxu0 0
        %622 = vmatprep.subr.bf16.mxu0 0
        %623 = vmatpush1.bf16.xpose.msra.mxu0 0
        %624 = vmatprep.subr.bf16.mxu0 0
        %625 = vmatpush1.bf16.xpose.msra.mxu0 0
        %626 = vmatprep.subr.bf16.mxu0 0
        %627 = vmatpush1.bf16.xpose.msra.mxu0 0
        %628 = vmatprep.subr.bf16.mxu0 0
        %629 = vmatpush1.bf16.xpose.msra.mxu0 0
        %630 = vmatprep.subr.bf16.mxu0 0
        %631 = vmatpush1.bf16.xpose.msra.mxu0 0
        %632 = vmatprep.subr.bf16.mxu0 0
        %633 = vmatpush1.bf16.xpose.msra.mxu0 0
        %634 = vmatprep.subr.bf16.mxu0 0
        %635 = vmatpush1.bf16.xpose.msra.mxu0 0
        %636 = vmatprep.subr.bf16.mxu0 0
        %637 = vmatpush1.bf16.xpose.msra.mxu0 0
        %638 = vmatprep.mubr.bf16.mxu0 0
        %639 = vmatmul.mubr.bf16.gmra.mrb[0].mxu0 %v601
        %v640 = vpop.f32.mrb[0].mxu0
        %v641 = vadd.f32 0.0, %v640
        %v642 = vpop.f32.mrb[0].mxu0
        %v643 = vpop.f32.mrb[0].mxu0
        %v644 = vpop.f32.mrb[0].mxu0
        %645 = vdwg.mxu0
        %v646 = vsel %vm599, %v641, -inf
        %647 = vmax.xlane.f32.xlu0 %v646
        %v648 = vpop.xlane.xlu0 %647
        %v649 = vsub.f32 %v641, %v648
        %v650 = vmul.f32 %v649, 1.442695
        %v651 = vpow.pop %v650
        %v652 = vsel %vm599, %v651, 0.0
        %653 = vadd.xlane.f32.xlu0 %v652
        %v654 = vpop.xlane.xlu0 %653
        %v655 = vrcp.pop %v654
        %v656 = vmul.f32 %v651, %v655
        %v657 = vpack.c.bf16 %v656, %v656
        %659 = vrot.lane.b32.xlu0 %v598, 96
        %v660 = vpop.permute.xlu0 %659
        %v662 = vsel %vm599, %v657, 0
        %vm664 = vcmask 1043456
        %v666 = vsel %vm664, %v660, 0
        %668 = vmatprep.subr.bf16.mxu0 0
        %669 = vmatpush1.bf16.msra.mxu0 %v666
        %670 = vmatprep.subr.bf16.mxu0 0
        %671 = vmatpush1.bf16.msra.mxu0 0
        %672 = vmatprep.subr.bf16.mxu0 0
        %673 = vmatpush1.bf16.msra.mxu0 0
        %674 = vmatprep.subr.bf16.mxu0 0
        %675 = vmatpush1.bf16.msra.mxu0 0
        %676 = vmatprep.subr.bf16.mxu0 0
        %677 = vmatpush1.bf16.msra.mxu0 0
        %678 = vmatprep.subr.bf16.mxu0 0
        %679 = vmatpush1.bf16.msra.mxu0 0
        %680 = vmatprep.subr.bf16.mxu0 0
        %681 = vmatpush1.bf16.msra.mxu0 0
        %682 = vmatprep.subr.bf16.mxu0 0
        %683 = vmatpush1.bf16.msra.mxu0 0
        %684 = vmatprep.subr.bf16.mxu0 0
        %685 = vmatpush1.bf16.msra.mxu0 0
        %686 = vmatprep.subr.bf16.mxu0 0
        %687 = vmatpush1.bf16.msra.mxu0 0
        %688 = vmatprep.subr.bf16.mxu0 0
        %689 = vmatpush1.bf16.msra.mxu0 0
        %690 = vmatprep.subr.bf16.mxu0 0
        %691 = vmatpush1.bf16.msra.mxu0 0
        %692 = vmatprep.subr.bf16.mxu0 0
        %693 = vmatpush1.bf16.msra.mxu0 0
        %694 = vmatprep.subr.bf16.mxu0 0
        %695 = vmatpush1.bf16.msra.mxu0 0
        %696 = vmatprep.subr.bf16.mxu0 0
        %697 = vmatpush1.bf16.msra.mxu0 0
        %698 = vmatprep.subr.bf16.mxu0 0
        %699 = vmatpush1.bf16.msra.mxu0 0
        %700 = vmatprep.mubr.bf16.mxu0 0
        %701 = vmatmul.mubr.bf16.gmra.mrb[0].mxu0 %v662
        %v702 = vpop.f32.mrb[0].mxu0
        %v703 = vadd.f32 0.0, %v702
        %v704 = vpop.f32.mrb[0].mxu0
        %v705 = vpop.f32.mrb[0].mxu0
        %v706 = vpop.f32.mrb[0].mxu0
        %707 = vdwg.mxu0
        %v708 = vpack.c.bf16 %v703, %v703
        %v709 = vld [vmem:[%s6] sm:$0xf]
        %711 = vrot.lane.b32.xlu0 %v597, 120
        %v712 = vpop.permute.xlu0 %711
        %713 = vrot.lane.b32.xlu0 %v598, 120
        %v714 = vpop.permute.xlu0 %713
        %v716 = vsel %vm599, %v712, 0
        %v719 = vsel %vm599, %v714, 0
        %721 = vmatprep.subr.bf16.mxu0 0
        %722 = vmatpush1.bf16.xpose.msra.mxu0 %v719
        %723 = vmatprep.subr.bf16.mxu0 0
        %724 = vmatpush1.bf16.xpose.msra.mxu0 0
        %725 = vmatprep.subr.bf16.mxu0 0
        %726 = vmatpush1.bf16.xpose.msra.mxu0 0
        %727 = vmatprep.subr.bf16.mxu0 0
        %728 = vmatpush1.bf16.xpose.msra.mxu0 0
        %729 = vmatprep.subr.bf16.mxu0 0
        %730 = vmatpush1.bf16.xpose.msra.mxu0 0
        %731 = vmatprep.subr.bf16.mxu0 0
        %732 = vmatpush1.bf16.xpose.msra.mxu0 0
        %733 = vmatprep.subr.bf16.mxu0 0
        %734 = vmatpush1.bf16.xpose.msra.mxu0 0
        %735 = vmatprep.subr.bf16.mxu0 0
        %736 = vmatpush1.bf16.xpose.msra.mxu0 0
        %737 = vmatprep.subr.bf16.mxu0 0
        %738 = vmatpush1.bf16.xpose.msra.mxu0 0
        %739 = vmatprep.subr.bf16.mxu0 0
        %740 = vmatpush1.bf16.xpose.msra.mxu0 0
        %741 = vmatprep.subr.bf16.mxu0 0
        %742 = vmatpush1.bf16.xpose.msra.mxu0 0
        %743 = vmatprep.subr.bf16.mxu0 0
        %744 = vmatpush1.bf16.xpose.msra.mxu0 0
        %745 = vmatprep.subr.bf16.mxu0 0
        %746 = vmatpush1.bf16.xpose.msra.mxu0 0
        %747 = vmatprep.subr.bf16.mxu0 0
        %748 = vmatpush1.bf16.xpose.msra.mxu0 0
        %749 = vmatprep.subr.bf16.mxu0 0
        %750 = vmatpush1.bf16.xpose.msra.mxu0 0
        %751 = vmatprep.subr.bf16.mxu0 0
        %752 = vmatpush1.bf16.xpose.msra.mxu0 0
        %753 = vmatprep.mubr.bf16.mxu0 0
        %754 = vmatmul.mubr.bf16.gmra.mrb[0].mxu0 %v716
        %v755 = vpop.f32.mrb[0].mxu0
        %v756 = vadd.f32 0.0, %v755
        %v757 = vpop.f32.mrb[0].mxu0
        %v758 = vpop.f32.mrb[0].mxu0
        %v759 = vpop.f32.mrb[0].mxu0
        %760 = vdwg.mxu0
        %v761 = vsel %vm599, %v756, -inf
        %762 = vmax.xlane.f32.xlu0 %v761
        %v763 = vpop.xlane.xlu0 %762
        %v764 = vsub.f32 %v756, %v763
        %v765 = vmul.f32 %v764, 1.442695
        %v766 = vpow.pop %v765
        %v767 = vsel %vm599, %v766, 0.0
        %768 = vadd.xlane.f32.xlu0 %v767
        %v769 = vpop.xlane.xlu0 %768
        %v770 = vrcp.pop %v769
        %v771 = vmul.f32 %v766, %v770
        %v772 = vpack.c.bf16 %v771, %v771
        %773 = vrot.lane.b32.xlu0 %v598, 88
        %v774 = vpop.permute.xlu0 %773
        %v776 = vsel %vm599, %v772, 0
        %v779 = vsel %vm664, %v774, 0
        %781 = vmatprep.subr.bf16.mxu0 0
        %782 = vmatpush1.bf16.msra.mxu0 %v779
        %783 = vmatprep.subr.bf16.mxu0 0
        %784 = vmatpush1.bf16.msra.mxu0 0
        %785 = vmatprep.subr.bf16.mxu0 0
        %786 = vmatpush1.bf16.msra.mxu0 0
        %787 = vmatprep.subr.bf16.mxu0 0
        %788 = vmatpush1.bf16.msra.mxu0 0
        %789 = vmatprep.subr.bf16.mxu0 0
        %790 = vmatpush1.bf16.msra.mxu0 0
        %791 = vmatprep.subr.bf16.mxu0 0
        %792 = vmatpush1.bf16.msra.mxu0 0
        %793 = vmatprep.subr.bf16.mxu0 0
        %794 = vmatpush1.bf16.msra.mxu0 0
        %795 = vmatprep.subr.bf16.mxu0 0
        %796 = vmatpush1.bf16.msra.mxu0 0
        %797 = vmatprep.subr.bf16.mxu0 0
        %798 = vmatpush1.bf16.msra.mxu0 0
        %799 = vmatprep.subr.bf16.mxu0 0
        %800 = vmatpush1.bf16.msra.mxu0 0
        %801 = vmatprep.subr.bf16.mxu0 0
        %802 = vmatpush1.bf16.msra.mxu0 0
        %803 = vmatprep.subr.bf16.mxu0 0
        %804 = vmatpush1.bf16.msra.mxu0 0
        %805 = vmatprep.subr.bf16.mxu0 0
        %806 = vmatpush1.bf16.msra.mxu0 0
        %807 = vmatprep.subr.bf16.mxu0 0
        %808 = vmatpush1.bf16.msra.mxu0 0
        %809 = vmatprep.subr.bf16.mxu0 0
        %810 = vmatpush1.bf16.msra.mxu0 0
        %811 = vmatprep.subr.bf16.mxu0 0
        %812 = vmatpush1.bf16.msra.mxu0 0
        %813 = vmatprep.mubr.bf16.mxu0 0
        %814 = vmatmul.mubr.bf16.gmra.mrb[0].mxu0 %v776
        %v815 = vpop.f32.mrb[0].mxu0
        %v816 = vadd.f32 0.0, %v815
        %v817 = vpop.f32.mrb[0].mxu0
        %v818 = vpop.f32.mrb[0].mxu0
        %v819 = vpop.f32.mrb[0].mxu0
        %820 = vdwg.mxu0
        %v821 = vpack.c.bf16 %v816, %v816
        %v822 = vld [vmem:[%s6 + $0x4] sm:$0xf]
        %v824 = vsel %vm599, %v821, 0
        %v827 = vsel %vm664, %v822, 0
        %829 = vmatprep.subr.bf16.mxu0 0
        %830 = vmatpush1.bf16.msra.mxu0 %v827
        %831 = vmatprep.subr.bf16.mxu0 0
        %832 = vmatpush1.bf16.msra.mxu0 0
        %833 = vmatprep.subr.bf16.mxu0 0
        %834 = vmatpush1.bf16.msra.mxu0 0
        %835 = vmatprep.subr.bf16.mxu0 0
        %836 = vmatpush1.bf16.msra.mxu0 0
        %837 = vmatprep.subr.bf16.mxu0 0
        %838 = vmatpush1.bf16.msra.mxu0 0
        %839 = vmatprep.subr.bf16.mxu0 0
        %840 = vmatpush1.bf16.msra.mxu0 0
        %841 = vmatprep.subr.bf16.mxu0 0
        %842 = vmatpush1.bf16.msra.mxu0 0
        %843 = vmatprep.subr.bf16.mxu0 0
        %844 = vmatpush1.bf16.msra.mxu0 0
        %845 = vmatprep.subr.bf16.mxu0 0
        %846 = vmatpush1.bf16.msra.mxu0 0
        %847 = vmatprep.subr.bf16.mxu0 0
        %848 = vmatpush1.bf16.msra.mxu0 0
        %849 = vmatprep.subr.bf16.mxu0 0
        %850 = vmatpush1.bf16.msra.mxu0 0
        %851 = vmatprep.subr.bf16.mxu0 0
        %852 = vmatpush1.bf16.msra.mxu0 0
        %853 = vmatprep.subr.bf16.mxu0 0
        %854 = vmatpush1.bf16.msra.mxu0 0
        %855 = vmatprep.subr.bf16.mxu0 0
        %856 = vmatpush1.bf16.msra.mxu0 0
        %857 = vmatprep.subr.bf16.mxu0 0
        %858 = vmatpush1.bf16.msra.mxu0 0
        %859 = vmatprep.subr.bf16.mxu0 0
        %860 = vmatpush1.bf16.msra.mxu0 0
        %861 = vmatprep.mubr.bf16.mxu0 0
        %862 = vmatmul.mubr.bf16.gmra.mrb[0].mxu0 %v824
        %v863 = vpop.f32.mrb[0].mxu0
        %v864 = vadd.f32 0.0, %v863
        %v865 = vpop.f32.mrb[0].mxu0
        %v866 = vpop.f32.mrb[0].mxu0
        %v867 = vpop.f32.mrb[0].mxu0
        %868 = vdwg.mxu0
        %v870 = vsel %vm599, %v708, 0
        %v873 = vsel %vm664, %v709, 0
        %875 = vmatprep.subr.bf16.mxu0 0
        %876 = vmatpush1.bf16.msra.mxu0 %v873
        %877 = vmatprep.subr.bf16.mxu0 0
        %878 = vmatpush1.bf16.msra.mxu0 0
        %879 = vmatprep.subr.bf16.mxu0 0
        %880 = vmatpush1.bf16.msra.mxu0 0
        %881 = vmatprep.subr.bf16.mxu0 0
        %882 = vmatpush1.bf16.msra.mxu0 0
        %883 = vmatprep.subr.bf16.mxu0 0
        %884 = vmatpush1.bf16.msra.mxu0 0
        %885 = vmatprep.subr.bf16.mxu0 0
        %886 = vmatpush1.bf16.msra.mxu0 0
        %887 = vmatprep.subr.bf16.mxu0 0
        %888 = vmatpush1.bf16.msra.mxu0 0
        %889 = vmatprep.subr.bf16.mxu0 0
        %890 = vmatpush1.bf16.msra.mxu0 0
        %891 = vmatprep.subr.bf16.mxu0 0
        %892 = vmatpush1.bf16.msra.mxu0 0
        %893 = vmatprep.subr.bf16.mxu0 0
        %894 = vmatpush1.bf16.msra.mxu0 0
        %895 = vmatprep.subr.bf16.mxu0 0
        %896 = vmatpush1.bf16.msra.mxu0 0
        %897 = vmatprep.subr.bf16.mxu0 0
        %898 = vmatpush1.bf16.msra.mxu0 0
        %899 = vmatprep.subr.bf16.mxu0 0
        %900 = vmatpush1.bf16.msra.mxu0 0
        %901 = vmatprep.subr.bf16.mxu0 0
        %902 = vmatpush1.bf16.msra.mxu0 0
        %903 = vmatprep.subr.bf16.mxu0 0
        %904 = vmatpush1.bf16.msra.mxu0 0
        %905 = vmatprep.subr.bf16.mxu0 0
        %906 = vmatpush1.bf16.msra.mxu0 0
        %907 = vmatprep.mubr.bf16.mxu0 0
        %908 = vmatmul.mubr.bf16.gmra.mrb[0].mxu0 %v870
        %v909 = vpop.f32.mrb[0].mxu0
        %v910 = vadd.f32 %v864, %v909
        %v911 = vpop.f32.mrb[0].mxu0
        %v912 = vpop.f32.mrb[0].mxu0
        %v913 = vpop.f32.mrb[0].mxu0
        %914 = vdwg.mxu0
        %915 = vrot.lane.b32.xlu0 %v597, 112
        %v916 = vpop.permute.xlu0 %915
        %917 = vrot.lane.b32.xlu0 %v598, 112
        %v918 = vpop.permute.xlu0 %917
        %v920 = vsel %vm599, %v916, 0
        %v923 = vsel %vm599, %v918, 0
        %925 = vmatprep.subr.bf16.mxu0 0
        %926 = vmatpush1.bf16.xpose.msra.mxu0 %v923
        %927 = vmatprep.subr.bf16.mxu0 0
        %928 = vmatpush1.bf16.xpose.msra.mxu0 0
        %929 = vmatprep.subr.bf16.mxu0 0
        %930 = vmatpush1.bf16.xpose.msra.mxu0 0
        %931 = vmatprep.subr.bf16.mxu0 0
        %932 = vmatpush1.bf16.xpose.msra.mxu0 0
        %933 = vmatprep.subr.bf16.mxu0 0
        %934 = vmatpush1.bf16.xpose.msra.mxu0 0
        %935 = vmatprep.subr.bf16.mxu0 0
        %936 = vmatpush1.bf16.xpose.msra.mxu0 0
        %937 = vmatprep.subr.bf16.mxu0 0
        %938 = vmatpush1.bf16.xpose.msra.mxu0 0
        %939 = vmatprep.subr.bf16.mxu0 0
        %940 = vmatpush1.bf16.xpose.msra.mxu0 0
        %941 = vmatprep.subr.bf16.mxu0 0
        %942 = vmatpush1.bf16.xpose.msra.mxu0 0
        %943 = vmatprep.subr.bf16.mxu0 0
        %944 = vmatpush1.bf16.xpose.msra.mxu0 0
        %945 = vmatprep.subr.bf16.mxu0 0
        %946 = vmatpush1.bf16.xpose.msra.mxu0 0
        %947 = vmatprep.subr.bf16.mxu0 0
        %948 = vmatpush1.bf16.xpose.msra.mxu0 0
        %949 = vmatprep.subr.bf16.mxu0 0
        %950 = vmatpush1.bf16.xpose.msra.mxu0 0
        %951 = vmatprep.subr.bf16.mxu0 0
        %952 = vmatpush1.bf16.xpose.msra.mxu0 0
        %953 = vmatprep.subr.bf16.mxu0 0
        %954 = vmatpush1.bf16.xpose.msra.mxu0 0
        %955 = vmatprep.subr.bf16.mxu0 0
        %956 = vmatpush1.bf16.xpose.msra.mxu0 0
        %957 = vmatprep.mubr.bf16.mxu0 0
        %958 = vmatmul.mubr.bf16.gmra.mrb[0].mxu0 %v920
        %v959 = vpop.f32.mrb[0].mxu0
        %v960 = vadd.f32 0.0, %v959
        %v961 = vpop.f32.mrb[0].mxu0
        %v962 = vpop.f32.mrb[0].mxu0
        %v963 = vpop.f32.mrb[0].mxu0
        %964 = vdwg.mxu0
        %v965 = vsel %vm599, %v960, -inf
        %966 = vmax.xlane.f32.xlu0 %v965
        %v967 = vpop.xlane.xlu0 %966
        %v968 = vsub.f32 %v960, %v967
        %v969 = vmul.f32 %v968, 1.442695
        %v970 = vpow.pop %v969
        %v971 = vsel %vm599, %v970, 0.0
        %972 = vadd.xlane.f32.xlu0 %v971
        %v973 = vpop.xlane.xlu0 %972
        %v974 = vrcp.pop %v973
        %v975 = vmul.f32 %v970, %v974
        %v976 = vpack.c.bf16 %v975, %v975
        %977 = vrot.lane.b32.xlu0 %v598, 80
        %v978 = vpop.permute.xlu0 %977
        %v980 = vsel %vm599, %v976, 0
        %v983 = vsel %vm664, %v978, 0
        %985 = vmatprep.subr.bf16.mxu0 0
        %986 = vmatpush1.bf16.msra.mxu0 %v983
        %987 = vmatprep.subr.bf16.mxu0 0
        %988 = vmatpush1.bf16.msra.mxu0 0
        %989 = vmatprep.subr.bf16.mxu0 0
        %990 = vmatpush1.bf16.msra.mxu0 0
        %991 = vmatprep.subr.bf16.mxu0 0
        %992 = vmatpush1.bf16.msra.mxu0 0
        %993 = vmatprep.subr.bf16.mxu0 0
        %994 = vmatpush1.bf16.msra.mxu0 0
        %995 = vmatprep.subr.bf16.mxu0 0
        %996 = vmatpush1.bf16.msra.mxu0 0
        %997 = vmatprep.subr.bf16.mxu0 0
        %998 = vmatpush1.bf16.msra.mxu0 0
        %999 = vmatprep.subr.bf16.mxu0 0
        %1000 = vmatpush1.bf16.msra.mxu0 0
        %1001 = vmatprep.subr.bf16.mxu0 0
        %1002 = vmatpush1.bf16.msra.mxu0 0
        %1003 = vmatprep.subr.bf16.mxu0 0
        %1004 = vmatpush1.bf16.msra.mxu0 0
        %1005 = vmatprep.subr.bf16.mxu0 0
        %1006 = vmatpush1.bf16.msra.mxu0 0
        %1007 = vmatprep.subr.bf16.mxu0 0
        %1008 = vmatpush1.bf16.msra.mxu0 0
        %1009 = vmatprep.subr.bf16.mxu0 0
        %1010 = vmatpush1.bf16.msra.mxu0 0
        %1011 = vmatprep.subr.bf16.mxu0 0
        %1012 = vmatpush1.bf16.msra.mxu0 0
        %1013 = vmatprep.subr.bf16.mxu0 0
        %1014 = vmatpush1.bf16.msra.mxu0 0
        %1015 = vmatprep.subr.bf16.mxu0 0
        %1016 = vmatpush1.bf16.msra.mxu0 0
        %1017 = vmatprep.mubr.bf16.mxu0 0
        %1018 = vmatmul.mubr.bf16.gmra.mrb[0].mxu0 %v980
        %v1019 = vpop.f32.mrb[0].mxu0
        %v1020 = vadd.f32 0.0, %v1019
        %v1021 = vpop.f32.mrb[0].mxu0
        %v1022 = vpop.f32.mrb[0].mxu0
        %v1023 = vpop.f32.mrb[0].mxu0
        %1024 = vdwg.mxu0
        %v1025 = vpack.c.bf16 %v1020, %v1020
        %v1026 = vld [vmem:[%s6 + $0x8] sm:$0xf]
        %v1028 = vsel %vm599, %v1025, 0
        %v1031 = vsel %vm664, %v1026, 0
        %1033 = vmatprep.subr.bf16.mxu0 0
        %1034 = vmatpush1.bf16.msra.mxu0 %v1031
        %1035 = vmatprep.subr.bf16.mxu0 0
        %1036 = vmatpush1.bf16.msra.mxu0 0
        %1037 = vmatprep.subr.bf16.mxu0 0
        %1038 = vmatpush1.bf16.msra.mxu0 0
        %1039 = vmatprep.subr.bf16.mxu0 0
        %1040 = vmatpush1.bf16.msra.mxu0 0
        %1041 = vmatprep.subr.bf16.mxu0 0
        %1042 = vmatpush1.bf16.msra.mxu0 0
        %1043 = vmatprep.subr.bf16.mxu0 0
        %1044 = vmatpush1.bf16.msra.mxu0 0
        %1045 = vmatprep.subr.bf16.mxu0 0
        %1046 = vmatpush1.bf16.msra.mxu0 0
        %1047 = vmatprep.subr.bf16.mxu0 0
        %1048 = vmatpush1.bf16.msra.mxu0 0
        %1049 = vmatprep.subr.bf16.mxu0 0
        %1050 = vmatpush1.bf16.msra.mxu0 0
        %1051 = vmatprep.subr.bf16.mxu0 0
        %1052 = vmatpush1.bf16.msra.mxu0 0
        %1053 = vmatprep.subr.bf16.mxu0 0
        %1054 = vmatpush1.bf16.msra.mxu0 0
        %1055 = vmatprep.subr.bf16.mxu0 0
        %1056 = vmatpush1.bf16.msra.mxu0 0
        %1057 = vmatprep.subr.bf16.mxu0 0
        %1058 = vmatpush1.bf16.msra.mxu0 0
        %1059 = vmatprep.subr.bf16.mxu0 0
        %1060 = vmatpush1.bf16.msra.mxu0 0
        %1061 = vmatprep.subr.bf16.mxu0 0
        %1062 = vmatpush1.bf16.msra.mxu0 0
        %1063 = vmatprep.subr.bf16.mxu0 0
        %1064 = vmatpush1.bf16.msra.mxu0 0
        %1065 = vmatprep.mubr.bf16.mxu0 0
        %1066 = vmatmul.mubr.bf16.gmra.mrb[0].mxu0 %v1028
        %v1067 = vpop.f32.mrb[0].mxu0
        %v1068 = vadd.f32 0.0, %v1067
        %v1069 = vpop.f32.mrb[0].mxu0
        %v1070 = vpop.f32.mrb[0].mxu0
        %v1071 = vpop.f32.mrb[0].mxu0
        %1072 = vdwg.mxu0
        %v1073 = vadd.f32 %v910, %v1068
        %1074 = vrot.lane.b32.xlu0 %v597, 104
        %v1075 = vpop.permute.xlu0 %1074
        %1076 = vrot.lane.b32.xlu0 %v598, 104
        %v1077 = vpop.permute.xlu0 %1076
        %v1079 = vsel %vm599, %v1075, 0
        %v1082 = vsel %vm599, %v1077, 0
        %1084 = vmatprep.subr.bf16.mxu0 0
        %1085 = vmatpush1.bf16.xpose.msra.mxu0 %v1082
        %1086 = vmatprep.subr.bf16.mxu0 0
        %1087 = vmatpush1.bf16.xpose.msra.mxu0 0
        %1088 = vmatprep.subr.bf16.mxu0 0
        %1089 = vmatpush1.bf16.xpose.msra.mxu0 0
        %1090 = vmatprep.subr.bf16.mxu0 0
        %1091 = vmatpush1.bf16.xpose.msra.mxu0 0
        %1092 = vmatprep.subr.bf16.mxu0 0
        %1093 = vmatpush1.bf16.xpose.msra.mxu0 0
        %1094 = vmatprep.subr.bf16.mxu0 0
        %1095 = vmatpush1.bf16.xpose.msra.mxu0 0
        %1096 = vmatprep.subr.bf16.mxu0 0
        %1097 = vmatpush1.bf16.xpose.msra.mxu0 0
        %1098 = vmatprep.subr.bf16.mxu0 0
        %1099 = vmatpush1.bf16.xpose.msra.mxu0 0
        %1100 = vmatprep.subr.bf16.mxu0 0
        %1101 = vmatpush1.bf16.xpose.msra.mxu0 0
        %1102 = vmatprep.subr.bf16.mxu0 0
        %1103 = vmatpush1.bf16.xpose.msra.mxu0 0
        %1104 = vmatprep.subr.bf16.mxu0 0
        %1105 = vmatpush1.bf16.xpose.msra.mxu0 0
        %1106 = vmatprep.subr.bf16.mxu0 0
        %1107 = vmatpush1.bf16.xpose.msra.mxu0 0
        %1108 = vmatprep.subr.bf16.mxu0 0
        %1109 = vmatpush1.bf16.xpose.msra.mxu0 0
        %1110 = vmatprep.subr.bf16.mxu0 0
        %1111 = vmatpush1.bf16.xpose.msra.mxu0 0
        %1112 = vmatprep.subr.bf16.mxu0 0
        %1113 = vmatpush1.bf16.xpose.msra.mxu0 0
        %1114 = vmatprep.subr.bf16.mxu0 0
        %1115 = vmatpush1.bf16.xpose.msra.mxu0 0
        %1116 = vmatprep.mubr.bf16.mxu0 0
        %1117 = vmatmul.mubr.bf16.gmra.mrb[0].mxu0 %v1079
        %v1118 = vpop.f32.mrb[0].mxu0
        %v1119 = vadd.f32 0.0, %v1118
        %v1120 = vpop.f32.mrb[0].mxu0
        %v1121 = vpop.f32.mrb[0].mxu0
        %v1122 = vpop.f32.mrb[0].mxu0
        %1123 = vdwg.mxu0
        %v1124 = vsel %vm599, %v1119, -inf
        %1125 = vmax.xlane.f32.xlu0 %v1124
        %v1126 = vpop.xlane.xlu0 %1125
        %v1127 = vsub.f32 %v1119, %v1126
        %v1128 = vmul.f32 %v1127, 1.442695
        %v1129 = vpow.pop %v1128
        %v1130 = vsel %vm599, %v1129, 0.0
        %1131 = vadd.xlane.f32.xlu0 %v1130
        %v1132 = vpop.xlane.xlu0 %1131
        %v1133 = vrcp.pop %v1132
        %v1134 = vmul.f32 %v1129, %v1133
        %v1135 = vpack.c.bf16 %v1134, %v1134
        %1136 = vrot.lane.b32.xlu0 %v598, 72
        %v1137 = vpop.permute.xlu0 %1136
        %v1139 = vsel %vm599, %v1135, 0
        %v1142 = vsel %vm664, %v1137, 0
        %1144 = vmatprep.subr.bf16.mxu0 0
        %1145 = vmatpush1.bf16.msra.mxu0 %v1142
        %1146 = vmatprep.subr.bf16.mxu0 0
        %1147 = vmatpush1.bf16.msra.mxu0 0
        %1148 = vmatprep.subr.bf16.mxu0 0
        %1149 = vmatpush1.bf16.msra.mxu0 0
        %1150 = vmatprep.subr.bf16.mxu0 0
        %1151 = vmatpush1.bf16.msra.mxu0 0
        %1152 = vmatprep.subr.bf16.mxu0 0
        %1153 = vmatpush1.bf16.msra.mxu0 0
        %1154 = vmatprep.subr.bf16.mxu0 0
        %1155 = vmatpush1.bf16.msra.mxu0 0
        %1156 = vmatprep.subr.bf16.mxu0 0
        %1157 = vmatpush1.bf16.msra.mxu0 0
        %1158 = vmatprep.subr.bf16.mxu0 0
        %1159 = vmatpush1.bf16.msra.mxu0 0
        %1160 = vmatprep.subr.bf16.mxu0 0
        %1161 = vmatpush1.bf16.msra.mxu0 0
        %1162 = vmatprep.subr.bf16.mxu0 0
        %1163 = vmatpush1.bf16.msra.mxu0 0
        %1164 = vmatprep.subr.bf16.mxu0 0
        %1165 = vmatpush1.bf16.msra.mxu0 0
        %1166 = vmatprep.subr.bf16.mxu0 0
        %1167 = vmatpush1.bf16.msra.mxu0 0
        %1168 = vmatprep.subr.bf16.mxu0 0
        %1169 = vmatpush1.bf16.msra.mxu0 0
        %1170 = vmatprep.subr.bf16.mxu0 0
        %1171 = vmatpush1.bf16.msra.mxu0 0
        %1172 = vmatprep.subr.bf16.mxu0 0
        %1173 = vmatpush1.bf16.msra.mxu0 0
        %1174 = vmatprep.subr.bf16.mxu0 0
        %1175 = vmatpush1.bf16.msra.mxu0 0
        %1176 = vmatprep.mubr.bf16.mxu0 0
        %1177 = vmatmul.mubr.bf16.gmra.mrb[0].mxu0 %v1139
        %v1178 = vpop.f32.mrb[0].mxu0
        %v1179 = vadd.f32 0.0, %v1178
        %v1180 = vpop.f32.mrb[0].mxu0
        %v1181 = vpop.f32.mrb[0].mxu0
        %v1182 = vpop.f32.mrb[0].mxu0
        %1183 = vdwg.mxu0
        %v1184 = vpack.c.bf16 %v1179, %v1179
        %v1185 = vld [vmem:[%s6 + $0xc] sm:$0xf]
        %v1187 = vsel %vm599, %v1184, 0
        %v1190 = vsel %vm664, %v1185, 0
        %1192 = vmatprep.subr.bf16.mxu0 0
        %1193 = vmatpush1.bf16.msra.mxu0 %v1190
        %1194 = vmatprep.subr.bf16.mxu0 0
        %1195 = vmatpush1.bf16.msra.mxu0 0
        %1196 = vmatprep.subr.bf16.mxu0 0
        %1197 = vmatpush1.bf16.msra.mxu0 0
        %1198 = vmatprep.subr.bf16.mxu0 0
        %1199 = vmatpush1.bf16.msra.mxu0 0
        %1200 = vmatprep.subr.bf16.mxu0 0
        %1201 = vmatpush1.bf16.msra.mxu0 0
        %1202 = vmatprep.subr.bf16.mxu0 0
        %1203 = vmatpush1.bf16.msra.mxu0 0
        %1204 = vmatprep.subr.bf16.mxu0 0
        %1205 = vmatpush1.bf16.msra.mxu0 0
        %1206 = vmatprep.subr.bf16.mxu0 0
        %1207 = vmatpush1.bf16.msra.mxu0 0
        %1208 = vmatprep.subr.bf16.mxu0 0
        %1209 = vmatpush1.bf16.msra.mxu0 0
        %1210 = vmatprep.subr.bf16.mxu0 0
        %1211 = vmatpush1.bf16.msra.mxu0 0
        %1212 = vmatprep.subr.bf16.mxu0 0
        %1213 = vmatpush1.bf16.msra.mxu0 0
        %1214 = vmatprep.subr.bf16.mxu0 0
        %1215 = vmatpush1.bf16.msra.mxu0 0
        %1216 = vmatprep.subr.bf16.mxu0 0
        %1217 = vmatpush1.bf16.msra.mxu0 0
        %1218 = vmatprep.subr.bf16.mxu0 0
        %1219 = vmatpush1.bf16.msra.mxu0 0
        %1220 = vmatprep.subr.bf16.mxu0 0
        %1221 = vmatpush1.bf16.msra.mxu0 0
        %1222 = vmatprep.subr.bf16.mxu0 0
        %1223 = vmatpush1.bf16.msra.mxu0 0
        %1224 = vmatprep.mubr.bf16.mxu0 0
        %1225 = vmatmul.mubr.bf16.gmra.mrb[0].mxu0 %v1187
        %v1226 = vpop.f32.mrb[0].mxu0
        %v1227 = vadd.f32 0.0, %v1226
        %v1228 = vpop.f32.mrb[0].mxu0
        %v1229 = vpop.f32.mrb[0].mxu0
        %v1230 = vpop.f32.mrb[0].mxu0
        %1231 = vdwg.mxu0
        %v1232 = vadd.f32 %v1073, %v1227
        %v1233 = vld [vmem:[%s7] sm:$0x1]
        %v1235 = vlaneseq
        %v1236 = vshrl.u32 %v1235, 7
        %v1237 = vsub.s32 0, %v1236
        %v1238 = vrot.slane %v1233, %v1237
        %v1240 = vadd.f32 %v1232, %v1238
        %v1241 = vadd.f32 %v1240, %v459
        %v1242 = vsel %vm486, %v1241, 0.0
        %1243 = vadd.xlane.f32.xlu0 %v1242
        %v1244 = vpop.xlane.xlu0 %1243
        %v1245 = vrcp.pop 32.0
        %v1246 = vmul.f32 %v1244, %v1245
        %v1247 = vsub.f32 %v1241, %v1246
        %v1248 = vmul.f32 %v1247, %v1247
        %v1249 = vsel %vm486, %v1248, 0.0
        %1250 = vadd.xlane.f32.xlu0 %v1249
        %v1251 = vpop.xlane.xlu0 %1250
        %v1252 = vmul.f32 %v1251, %v1245
        %v1253 = vadd.f32 %v1252, 1e-12
        %v1254 = vrsqrt.pop %v1253
        %v1255 = vmul.f32 %v1247, %v1254
        %v1256 = vld [vmem:[%s8] sm:$0x1]
        %v1258 = vlaneseq
        %v1259 = vshrl.u32 %v1258, 7
        %v1260 = vsub.s32 0, %v1259
        %v1261 = vrot.slane %v1256, %v1260
        %v1263 = vmul.f32 %v1255, %v1261
        %v1264 = vld [vmem:[%s9] sm:$0x1]
        %v1266 = vlaneseq
        %v1267 = vshrl.u32 %v1266, 7
        %v1268 = vsub.s32 0, %v1267
        %v1269 = vrot.slane %v1264, %v1268
        %v1271 = vadd.f32 %v1263, %v1269
        %1272 = vst.msk [vmem:[%s457] sm:$0xff] %vm486, %v1271
        %s1273 = sand.u32 %s275, 1
        %s1274 = scalar_lea.sflag [#allocation4], %s1273
        %s1275 = sand.u32 %s275, 1
        %s1276 = smul.addr %s1275, 8
        %s1277 = scalar_lea.vmem [#allocation10], %s1276
        // Predicated region
        $region77: #{tpu_custom_call.1} parent=59 // pred_check
          %p1278 = pneg %p285
        $region78: #{tpu_custom_call.1} parent=59 // pred_check_branch
          %1280 = sbr.rel (%p1278) target = $region80
        $region79: #{tpu_custom_call.1} parent=59 // pred_region
          %s1282 = ssub.s32 128, 128
          %1283 = vsyncadd %s1274, %s1282
          %s1284 = sadd.s32 %s36, %s35
          %s1285 = smul.addr %s1284, 128
          %s1286 = scalar_lea.hbm %s10, %s1285
          %s1288 = sshll.u32 %s1277, 4
          %s1289 = int_to_ptr.vmem [resolvable:$true] %s1288
          %1291 = dma.vmem_to_hbm [thread:$0]  %s1289, 128, %s1286, %s1274
        $region80: #{tpu_custom_call.1} parent=59 // pred_fallthru
          _
      $region60: #{tpu_custom_call.1} parent=5 // pred_fallthru
        _
      %p1292 = scmp.le.s32.totalorder 2, %s26
      // Predicated region
      $region81: #{tpu_custom_call.1} parent=5 // pred_check
        %p1293 = pneg %p1292
      $region82: #{tpu_custom_call.1} parent=5 // pred_check_branch
        %1295 = sbr.rel (%p1293) target = $region84
      $region83: #{tpu_custom_call.1} parent=5 // pred_region
        %s1296 = ssub.s32 %s26, 2
        // Predicated region
        $region85: #{tpu_custom_call.1} parent=83 // pred_check
          %p1297 = pneg %p291
        $region86: #{tpu_custom_call.1} parent=83 // pred_check_branch
          %1299 = sbr.rel (%p1297) target = $region88
        $region87: #{tpu_custom_call.1} parent=83 // pred_region
          %s1300 = sand.u32 %s276, 1
          %s1301 = scalar_lea.sflag [#allocation4], %s1300
          %s1302 = sand.u32 %s276, 1
          %s1303 = smul.addr %s1302, 8
          %s1304 = scalar_lea.vmem [#allocation10], %s1303
          %1305 = dma.done %s1301, 128
        $region88: #{tpu_custom_call.1} parent=83 // pred_fallthru
          _
      $region84: #{tpu_custom_call.1} parent=5 // pred_fallthru
        _
    $region6: #{tpu_custom_call.1} parent=1 // loop_footer
      %s30 = sadd.s32 1, %s26
    $region7: #{tpu_custom_call.1} parent=1 // loop_footer_branch
      %25 = sbr.rel target = $region3
    $region8: #{tpu_custom_call.1} parent=1 // loop_exit
      _
    %1306 = vsyncpa [#allocation3], 1
    %s1307 = scalar_lea.sflag [#allocation3], 1
    %1308 = vsyncpa %s1307, 1
    %1309 = vsyncpa [#allocation6], 1
    %s1310 = scalar_lea.sflag [#allocation6], 1
    %1311 = vsyncpa %s1310, 1
    %1312 = vsyncpa [#allocation9], 1
    %1313 = vsyncpa [#allocation4], 1
    %s1314 = scalar_lea.sflag [#allocation4], 1
    %1315 = vsyncpa %s1314, 1

</llo_original>
